<compile_context>
chip_gen: v6e
topology: v6e:2x2x1
jax: 0.10.0
libtpu: 0.0.40
codegen_flags: <defaults>
</compile_context>

<pallas_src>
import jax
import jax.numpy as jnp
from jax.experimental import pallas as pl
from jax.experimental.pallas import tpu as pltpu

# ---------------- model hyperparams (match nn.Module defaults, small batch/seq) ---
INPUT_SIZE = 128
LSTM_SIZE = 128          # must equal INPUT_SIZE for the shared seq scratch below
LSTM_LAYERS = 4
OUTPUT_SIZE = 128
N_CLASSES = 40
CLS_PAD = 128            # lane-dense classifier width (>= N_CLASSES)
BATCH = 2
BATCH_PAD = 8            # padded batch = one full (8,128) sublane tile
SEQ = 8


def lstm_head_kernel(x_ref, wih_ref, whh_ref, b_ref,
                     l0w_ref, l0b_ref, cw_ref, cb_ref,
                     feat_ref, cls_ref,
                     seq_ref, gates_ref):
    """One LSTM layer per grid step + the two linear heads at the last step.

    Grid: (LSTM_LAYERS,), sequential ("arbitrary").

    x_ref    : (T*BP, D)      time-major, batch padded to BP=8 (block idx const)
    wih_ref  : (1, D, 4H)     this layer's input->gates weights, order (i,f,o,g)
    whh_ref  : (1, H, 4H)     this layer's hidden->gates weights, order (i,f,o,g)
    b_ref    : (1, 1, 4H)     combined bias (b_ih + b_hh), same order
    l0w_ref  : (H, O), l0b_ref : (1, O)
    cw_ref   : (O, CLS_PAD), cb_ref : (1, CLS_PAD)    zero-padded classifier
    feat_ref : (BP, O)        written only at the last layer
    cls_ref  : (BP, CLS_PAD)  written only at the last layer
    seq_ref  : (T*BP, H)      persistent scratch: layer-output sequence
    gates_ref: (T*BP, 4H)     persistent scratch: staged input->gates projection
    """
    l = pl.program_id(0)
    n_layers = pl.num_programs(0)
    TBP = x_ref.shape[0]
    BP = feat_ref.shape[0]
    T = TBP // BP
    H = whh_ref.shape[1]

    # Layer 0 input is x; later layers read the previous layer's sequence.
    # (D == H, so the same scratch holds both.)
    @pl.when(l == 0)
    def _():
        seq_ref[...] = x_ref[...]

    # Batched input->gates projection over ALL timesteps of this layer with the
    # bias folded in, staged through VMEM so the t loop reads tile-aligned
    # (BP, 4H) slices instead of holding ~32 live vregs.
    gates_ref[...] = (
        jnp.dot(seq_ref[...], wih_ref[0], preferred_element_type=jnp.float32)
        + b_ref[0])

    whh = whh_ref[0]                      # read once, reused by all T steps
    h = jnp.zeros((BP, H), jnp.float32)
    c = jnp.zeros((BP, H), jnp.float32)
    hs = []
    for t in range(T):                    # T small & static -> unrolled
        g = gates_ref[t * BP:(t + 1) * BP, :]          # tile-aligned (BP, 4H)
        if t > 0:                         # h == 0 at t == 0: skip the matmul
            g = g + jnp.dot(h, whh, preferred_element_type=jnp.float32)
        # gate order (i, f, o, g): one nonlinearity over a contiguous 3H slab.
        # sigmoid(x) == 0.5*(tanh(0.5*x)+1): single EUP pass (vs exp + recip).
        sig = 0.5 * (jnp.tanh(0.5 * g[:, :3 * H]) + 1.0)
        i_g = sig[:, :H]
        f_g = sig[:, H:2 * H]
        o_g = sig[:, 2 * H:]
        g_g = jnp.tanh(g[:, 3 * H:])
        c = i_g * g_g if t == 0 else f_g * c + i_g * g_g
        h = o_g * jnp.tanh(c)
        hs.append(h)

    # One contiguous, unmasked store of this layer's whole output sequence for
    # the next layer (not needed for the top layer).
    @pl.when(l < n_layers - 1)
    def _():
        seq_ref[...] = jnp.concatenate(hs, axis=0)

    # Heads: only the top layer's last-timestep hidden state feeds them.
    @pl.when(l == n_layers - 1)
    def _():
        feat = (jnp.dot(h, l0w_ref[...], preferred_element_type=jnp.float32)
                + l0b_ref[...])
        feat_ref[...] = feat
        cls_ref[...] = (jnp.dot(feat, cw_ref[...],
                                preferred_element_type=jnp.float32)
                        + cb_ref[...])


def model_forward(x, packed):
    """x: (B, T, D) float32, batch_first like the PyTorch module."""
    B, T, D = x.shape
    H, O = LSTM_SIZE, OUTPUT_SIZE
    BP = BATCH_PAD
    c_pad = packed["cw"].shape[1]

    # Time-major, batch padded with zero rows to a full 8-row sublane tile.
    x_tm = jnp.swapaxes(x, 0, 1)                                    # (T, B, D)
    x_pad = jnp.zeros((T, BP, D), jnp.float32).at[:, :B, :].set(x_tm)
    x_flat = x_pad.reshape(T * BP, D)

    grid_spec = pltpu.PrefetchScalarGridSpec(
        num_scalar_prefetch=0,
        grid=(LSTM_LAYERS,),
        in_specs=[
            pl.BlockSpec((T * BP, D), lambda l: (0, 0)),        # x (DMA'd once)
            pl.BlockSpec((1, D, 4 * H), lambda l: (l, 0, 0)),   # wih[l]
            pl.BlockSpec((1, H, 4 * H), lambda l: (l, 0, 0)),   # whh[l]
            pl.BlockSpec((1, 1, 4 * H), lambda l: (l, 0, 0)),   # bias[l]
            pl.BlockSpec((H, O), lambda l: (0, 0)),             # L0 weight
            pl.BlockSpec((1, O), lambda l: (0, 0)),             # L0 bias
            pl.BlockSpec((O, c_pad), lambda l: (0, 0)),         # classifier W
            pl.BlockSpec((1, c_pad), lambda l: (0, 0)),         # classifier b
        ],
        out_specs=(
            pl.BlockSpec((BP, O), lambda l: (0, 0)),
            pl.BlockSpec((BP, c_pad), lambda l: (0, 0)),
        ),
        scratch_shapes=[
            pltpu.VMEM((T * BP, H), jnp.float32),       # layer-output sequence
            pltpu.VMEM((T * BP, 4 * H), jnp.float32),   # staged gates
        ],
    )

    feat_pad, cls_pad = pl.pallas_call(
        lstm_head_kernel,
        out_shape=(jax.ShapeDtypeStruct((BP, O), jnp.float32),
                   jax.ShapeDtypeStruct((BP, c_pad), jnp.float32)),
        grid_spec=grid_spec,
        compiler_params=pltpu.CompilerParams(
            dimension_semantics=("arbitrary",)),
    )(x_flat, packed["wih"], packed["whh"], packed["bias"],
      packed["l0w"], packed["l0b"], packed["cw"], packed["cb"])

    return feat_pad[:B], cls_pad[:B, :N_CLASSES]


def init_params(key):
    """Raw parameters mimicking nn.LSTM / nn.Linear (pre-transposed (in, out))."""
    H, D, L, O, C = LSTM_SIZE, INPUT_SIZE, LSTM_LAYERS, OUTPUT_SIZE, N_CLASSES
    keys = jax.random.split(key, 8)
    bound = 1.0 / jnp.sqrt(H)
    # PyTorch gate order (i, f, g, o); layer-0 input size == D == H so a single
    # stacked tensor works.
    wih_t = jax.random.uniform(keys[0], (L, D, 4 * H), jnp.float32, -bound, bound)
    whh_t = jax.random.uniform(keys[1], (L, H, 4 * H), jnp.float32, -bound, bound)
    b_ih = jax.random.uniform(keys[2], (L, 4 * H), jnp.float32, -bound, bound)
    b_hh = jax.random.uniform(keys[3], (L, 4 * H), jnp.float32, -bound, bound)
    l0w_t = jax.random.uniform(keys[4], (H, O), jnp.float32, -bound, bound)
    l0b = jax.random.uniform(keys[5], (1, O), jnp.float32, -bound, bound)
    cbound = 1.0 / jnp.sqrt(O)
    cw_t = jax.random.uniform(keys[6], (O, C), jnp.float32, -cbound, cbound)
    cb = jax.random.uniform(keys[7], (1, C), jnp.float32, -cbound, cbound)
    return dict(wih_t=wih_t, whh_t=whh_t, b_ih=b_ih, b_hh=b_hh,
                l0w_t=l0w_t, l0b=l0b, cw_t=cw_t, cb=cb)


def pack_params(p):
    """One-time host-side packing: gate reorder (i,f,g,o)->(i,f,o,g), bias
    combine, classifier lane-padding to 128 columns."""
    H = LSTM_SIZE

    def permute(w):
        return jnp.concatenate(
            [w[..., :2 * H], w[..., 3 * H:], w[..., 2 * H:3 * H]], axis=-1)

    bias = permute(p["b_ih"] + p["b_hh"]).reshape(LSTM_LAYERS, 1, 4 * H)
    cw = jnp.zeros((OUTPUT_SIZE, CLS_PAD), jnp.float32).at[:, :N_CLASSES].set(p["cw_t"])
    cb = jnp.zeros((1, CLS_PAD), jnp.float32).at[:, :N_CLASSES].set(p["cb"])
    return dict(wih=permute(p["wih_t"]), whh=permute(p["whh_t"]), bias=bias,
                l0w=p["l0w_t"], l0b=p["l0b"], cw=cw, cb=cb)


def reference_forward(x, p):
    """Pure-JAX reference of the original (unpermuted) math for correctness."""
    B, T, D = x.shape
    H, L = LSTM_SIZE, LSTM_LAYERS
    bias = p["b_ih"] + p["b_hh"]
    h = jnp.zeros((L, B, H), jnp.float32)
    c = jnp.zeros((L, B, H), jnp.float32)
    for t in range(T):
        inp = x[:, t, :]
        new_h, new_c = [], []
        for l in range(L):
            gates = inp @ p["wih_t"][l] + h[l] @ p["whh_t"][l] + bias[l]
            i_g = jax.nn.sigmoid(gates[:, 0 * H:1 * H])
            f_g = jax.nn.sigmoid(gates[:, 1 * H:2 * H])
            g_g = jnp.tanh(gates[:, 2 * H:3 * H])
            o_g = jax.nn.sigmoid(gates[:, 3 * H:4 * H])
            cl = f_g * c[l] + i_g * g_g
            hl = o_g * jnp.tanh(cl)
            new_h.append(hl)
            new_c.append(cl)
            inp = hl
        h = jnp.stack(new_h)
        c = jnp.stack(new_c)
    feat = h[-1] @ p["l0w_t"] + p["l0b"]
    cls_ = feat @ p["cw_t"] + p["cb"]
    return feat, cls_


if __name__ == "__main__":
    key = jax.random.PRNGKey(0)
    kx, kp = jax.random.split(key)
    x = jax.random.normal(kx, (BATCH, SEQ, INPUT_SIZE), jnp.float32)
    raw = init_params(kp)
    packed = pack_params(raw)

    feat, cls_ = model_forward(x, packed)
    jax.block_until_ready((feat, cls_))

    feat_ref, cls_ref = reference_forward(x, raw)
    assert feat.shape == (BATCH, OUTPUT_SIZE) and cls_.shape == (BATCH, N_CLASSES)
    # tanh-based sigmoid is mathematically exact; allow a small ULP-level margin.
    assert jnp.allclose(feat, feat_ref, atol=5e-4, rtol=5e-4)
    assert jnp.allclose(cls_, cls_ref, atol=5e-4, rtol=5e-4)

    print("KERNEL_OK")
</pallas_src>

<mosaic_0001>
module attributes {stable_mosaic.version = 11 : i64} {
  func.func @lstm_head_kernel(%arg0: i32, %arg1: memref<64x128xf32, #tpu.memory_space<vmem>>, %arg2: memref<1x128x512xf32, #tpu.memory_space<vmem>>, %arg3: memref<1x128x512xf32, #tpu.memory_space<vmem>>, %arg4: memref<1x1x512xf32, #tpu.memory_space<vmem>>, %arg5: memref<128x128xf32, #tpu.memory_space<vmem>>, %arg6: memref<1x128xf32, #tpu.memory_space<vmem>>, %arg7: memref<128x128xf32, #tpu.memory_space<vmem>>, %arg8: memref<1x128xf32, #tpu.memory_space<vmem>>, %arg9: memref<8x128xf32, #tpu.memory_space<vmem>>, %arg10: memref<8x128xf32, #tpu.memory_space<vmem>>, %arg11: memref<64x128xf32, #tpu.memory_space<vmem>>, %arg12: memref<64x512xf32, #tpu.memory_space<vmem>>) attributes {dimension_semantics = [#tpu.dimension_semantics<arbitrary>], iteration_bounds = array<i64: 4>, scalar_prefetch = 0 : i64, scratch_operands = 2 : i64, tpu.core_type = #tpu.core_type<tc>, window_params = [{pipeline_mode = #tpu.pipeline_mode<synchronous>, transform_indices = @transform_0, window_bounds = array<i64: 64, 128>}, {transform_indices = @transform_1, window_bounds = array<i64: 1, 128, 512>}, {transform_indices = @transform_2, window_bounds = array<i64: 1, 128, 512>}, {transform_indices = @transform_3, window_bounds = array<i64: 1, 1, 512>}, {pipeline_mode = #tpu.pipeline_mode<synchronous>, transform_indices = @transform_4, window_bounds = array<i64: 128, 128>}, {pipeline_mode = #tpu.pipeline_mode<synchronous>, transform_indices = @transform_5, window_bounds = array<i64: 1, 128>}, {pipeline_mode = #tpu.pipeline_mode<synchronous>, transform_indices = @transform_6, window_bounds = array<i64: 128, 128>}, {pipeline_mode = #tpu.pipeline_mode<synchronous>, transform_indices = @transform_7, window_bounds = array<i64: 1, 128>}, {pipeline_mode = #tpu.pipeline_mode<synchronous>, transform_indices = @transform_8, window_bounds = array<i64: 8, 128>}, {pipeline_mode = #tpu.pipeline_mode<synchronous>, transform_indices = @transform_9, window_bounds = array<i64: 8, 128>}]} {
    %c0_i32 = arith.constant 0 : i32
    %0 = arith.cmpi eq, %arg0, %c0_i32 : i32
    %1 = arith.extui %0 : i1 to i32
    %c0_i32_0 = arith.constant 0 : i32
    %2 = arith.cmpi ne, %1, %c0_i32_0 : i32
    scf.if %2 {
      %c0_56 = arith.constant 0 : index
      %c0_57 = arith.constant 0 : index
      %183 = vector.load %arg1[%c0_56, %c0_57] : memref<64x128xf32, #tpu.memory_space<vmem>>, vector<64x128xf32>
      %c0_58 = arith.constant 0 : index
      %c0_59 = arith.constant 0 : index
      %184 = vector.load %arg11[%c0_58, %c0_59] : memref<64x128xf32, #tpu.memory_space<vmem>>, vector<64x128xf32>
      tpu.vector_store %arg11[%c0_58, %c0_59], %183 {strides = array<i32>} : memref<64x128xf32, #tpu.memory_space<vmem>>, vector<64x128xf32>,
    } else {
    }
    %c0 = arith.constant 0 : index
    %c0_1 = arith.constant 0 : index
    %3 = vector.load %arg11[%c0, %c0_1] : memref<64x128xf32, #tpu.memory_space<vmem>>, vector<64x128xf32>
    %c0_2 = arith.constant 0 : index
    %c0_3 = arith.constant 0 : index
    %c0_4 = arith.constant 0 : index
    %4 = vector.load %arg2[%c0_2, %c0_3, %c0_4] : memref<1x128x512xf32, #tpu.memory_space<vmem>>, vector<1x128x512xf32>
    %5 = vector.shape_cast %4 : vector<1x128x512xf32> to vector<128x512xf32>
    %cst = arith.constant dense<0.000000e+00> : vector<64x512xf32>
    %6 = tpu.matmul %3, %5, %cst {dimension_numbers = #tpu.dot_dimension_numbers<[1], [0], [0], [1], [0, 0, 1, 1], [], []>} : vector<64x128xf32>, vector<128x512xf32>, vector<64x512xf32> -> vector<64x512xf32>
    %c0_5 = arith.constant 0 : index
    %c0_6 = arith.constant 0 : index
    %c0_7 = arith.constant 0 : index
    %7 = vector.load %arg4[%c0_5, %c0_6, %c0_7] : memref<1x1x512xf32, #tpu.memory_space<vmem>>, vector<1x1x512xf32>
    %8 = vector.shape_cast %7 : vector<1x1x512xf32> to vector<1x512xf32>
    %9 = vector.broadcast %8 : vector<1x512xf32> to vector<64x512xf32>
    %10 = arith.addf %6, %9 : vector<64x512xf32>
    %c0_8 = arith.constant 0 : index
    %c0_9 = arith.constant 0 : index
    %11 = vector.load %arg12[%c0_8, %c0_9] : memref<64x512xf32, #tpu.memory_space<vmem>>, vector<64x512xf32>
    tpu.vector_store %arg12[%c0_8, %c0_9], %10 {strides = array<i32>} : memref<64x512xf32, #tpu.memory_space<vmem>>, vector<64x512xf32>,
    %c0_10 = arith.constant 0 : index
    %c0_11 = arith.constant 0 : index
    %c0_12 = arith.constant 0 : index
    %12 = vector.load %arg3[%c0_10, %c0_11, %c0_12] : memref<1x128x512xf32, #tpu.memory_space<vmem>>, vector<1x128x512xf32>
    %13 = vector.shape_cast %12 : vector<1x128x512xf32> to vector<128x512xf32>
    %c0_13 = arith.constant 0 : index
    %c0_14 = arith.constant 0 : index
    %14 = vector.load %arg12[%c0_13, %c0_14] : memref<64x512xf32, #tpu.memory_space<vmem>>, vector<8x512xf32>
    %15 = vector.extract_strided_slice %14 {offsets = [0, 0], sizes = [8, 384], strides = [1, 1]} : vector<8x512xf32> to vector<8x384xf32>
    %cst_15 = arith.constant 5.000000e-01 : f32
    %16 = vector.broadcast %cst_15 : f32 to vector<8x384xf32>
    %17 = arith.mulf %16, %15 : vector<8x384xf32>
    %18 = math.tanh %17 : vector<8x384xf32>
    %cst_16 = arith.constant 1.000000e+00 : f32
    %19 = vector.broadcast %cst_16 : f32 to vector<8x384xf32>
    %20 = arith.addf %18, %19 : vector<8x384xf32>
    %cst_17 = arith.constant 5.000000e-01 : f32
    %21 = vector.broadcast %cst_17 : f32 to vector<8x384xf32>
    %22 = arith.mulf %21, %20 : vector<8x384xf32>
    %23 = vector.extract_strided_slice %22 {offsets = [0, 0], sizes = [8, 128], strides = [1, 1]} : vector<8x384xf32> to vector<8x128xf32>
    %24 = vector.extract_strided_slice %22 {offsets = [0, 256], sizes = [8, 128], strides = [1, 1]} : vector<8x384xf32> to vector<8x128xf32>
    %25 = vector.extract_strided_slice %14 {offsets = [0, 384], sizes = [8, 128], strides = [1, 1]} : vector<8x512xf32> to vector<8x128xf32>
    %26 = math.tanh %25 : vector<8x128xf32>
    %27 = arith.mulf %23, %26 : vector<8x128xf32>
    %28 = math.tanh %27 : vector<8x128xf32>
    %29 = arith.mulf %24, %28 : vector<8x128xf32>
    %c8 = arith.constant 8 : index
    %c0_18 = arith.constant 0 : index
    %30 = vector.load %arg12[%c8, %c0_18] : memref<64x512xf32, #tpu.memory_space<vmem>>, vector<8x512xf32>
    %cst_19 = arith.constant dense<0.000000e+00> : vector<8x512xf32>
    %31 = tpu.matmul %29, %13, %cst_19 {dimension_numbers = #tpu.dot_dimension_numbers<[1], [0], [0], [1], [0, 0, 1, 1], [], []>} : vector<8x128xf32>, vector<128x512xf32>, vector<8x512xf32> -> vector<8x512xf32>
    %32 = arith.addf %30, %31 : vector<8x512xf32>
    %33 = vector.extract_strided_slice %32 {offsets = [0, 0], sizes = [8, 384], strides = [1, 1]} : vector<8x512xf32> to vector<8x384xf32>
    %cst_20 = arith.constant 5.000000e-01 : f32
    %34 = vector.broadcast %cst_20 : f32 to vector<8x384xf32>
    %35 = arith.mulf %34, %33 : vector<8x384xf32>
    %36 = math.tanh %35 : vector<8x384xf32>
    %cst_21 = arith.constant 1.000000e+00 : f32
    %37 = vector.broadcast %cst_21 : f32 to vector<8x384xf32>
    %38 = arith.addf %36, %37 : vector<8x384xf32>
    %cst_22 = arith.constant 5.000000e-01 : f32
    %39 = vector.broadcast %cst_22 : f32 to vector<8x384xf32>
    %40 = arith.mulf %39, %38 : vector<8x384xf32>
    %41 = vector.extract_strided_slice %40 {offsets = [0, 0], sizes = [8, 128], strides = [1, 1]} : vector<8x384xf32> to vector<8x128xf32>
    %42 = vector.extract_strided_slice %40 {offsets = [0, 128], sizes = [8, 128], strides = [1, 1]} : vector<8x384xf32> to vector<8x128xf32>
    %43 = vector.extract_strided_slice %40 {offsets = [0, 256], sizes = [8, 128], strides = [1, 1]} : vector<8x384xf32> to vector<8x128xf32>
    %44 = vector.extract_strided_slice %32 {offsets = [0, 384], sizes = [8, 128], strides = [1, 1]} : vector<8x512xf32> to vector<8x128xf32>
    %45 = math.tanh %44 : vector<8x128xf32>
    %46 = arith.mulf %42, %27 : vector<8x128xf32>
    %47 = arith.mulf %41, %45 : vector<8x128xf32>
    %48 = arith.addf %46, %47 : vector<8x128xf32>
    %49 = math.tanh %48 : vector<8x128xf32>
    %50 = arith.mulf %43, %49 : vector<8x128xf32>
    %c16 = arith.constant 16 : index
    %c0_23 = arith.constant 0 : index
    %51 = vector.load %arg12[%c16, %c0_23] : memref<64x512xf32, #tpu.memory_space<vmem>>, vector<8x512xf32>
    %cst_24 = arith.constant dense<0.000000e+00> : vector<8x512xf32>
    %52 = tpu.matmul %50, %13, %cst_24 {dimension_numbers = #tpu.dot_dimension_numbers<[1], [0], [0], [1], [0, 0, 1, 1], [], []>} : vector<8x128xf32>, vector<128x512xf32>, vector<8x512xf32> -> vector<8x512xf32>
    %53 = arith.addf %51, %52 : vector<8x512xf32>
    %54 = vector.extract_strided_slice %53 {offsets = [0, 0], sizes = [8, 384], strides = [1, 1]} : vector<8x512xf32> to vector<8x384xf32>
    %cst_25 = arith.constant 5.000000e-01 : f32
    %55 = vector.broadcast %cst_25 : f32 to vector<8x384xf32>
    %56 = arith.mulf %55, %54 : vector<8x384xf32>
    %57 = math.tanh %56 : vector<8x384xf32>
    %cst_26 = arith.constant 1.000000e+00 : f32
    %58 = vector.broadcast %cst_26 : f32 to vector<8x384xf32>
    %59 = arith.addf %57, %58 : vector<8x384xf32>
    %cst_27 = arith.constant 5.000000e-01 : f32
    %60 = vector.broadcast %cst_27 : f32 to vector<8x384xf32>
    %61 = arith.mulf %60, %59 : vector<8x384xf32>
    %62 = vector.extract_strided_slice %61 {offsets = [0, 0], sizes = [8, 128], strides = [1, 1]} : vector<8x384xf32> to vector<8x128xf32>
    %63 = vector.extract_strided_slice %61 {offsets = [0, 128], sizes = [8, 128], strides = [1, 1]} : vector<8x384xf32> to vector<8x128xf32>
    %64 = vector.extract_strided_slice %61 {offsets = [0, 256], sizes = [8, 128], strides = [1, 1]} : vector<8x384xf32> to vector<8x128xf32>
    %65 = vector.extract_strided_slice %53 {offsets = [0, 384], sizes = [8, 128], strides = [1, 1]} : vector<8x512xf32> to vector<8x128xf32>
    %66 = math.tanh %65 : vector<8x128xf32>
    %67 = arith.mulf %63, %48 : vector<8x128xf32>
    %68 = arith.mulf %62, %66 : vector<8x128xf32>
    %69 = arith.addf %67, %68 : vector<8x128xf32>
    %70 = math.tanh %69 : vector<8x128xf32>
    %71 = arith.mulf %64, %70 : vector<8x128xf32>
    %c24 = arith.constant 24 : index
    %c0_28 = arith.constant 0 : index
    %72 = vector.load %arg12[%c24, %c0_28] : memref<64x512xf32, #tpu.memory_space<vmem>>, vector<8x512xf32>
    %cst_29 = arith.constant dense<0.000000e+00> : vector<8x512xf32>
    %73 = tpu.matmul %71, %13, %cst_29 {dimension_numbers = #tpu.dot_dimension_numbers<[1], [0], [0], [1], [0, 0, 1, 1], [], []>} : vector<8x128xf32>, vector<128x512xf32>, vector<8x512xf32> -> vector<8x512xf32>
    %74 = arith.addf %72, %73 : vector<8x512xf32>
    %75 = vector.extract_strided_slice %74 {offsets = [0, 0], sizes = [8, 384], strides = [1, 1]} : vector<8x512xf32> to vector<8x384xf32>
    %cst_30 = arith.constant 5.000000e-01 : f32
    %76 = vector.broadcast %cst_30 : f32 to vector<8x384xf32>
    %77 = arith.mulf %76, %75 : vector<8x384xf32>
    %78 = math.tanh %77 : vector<8x384xf32>
    %cst_31 = arith.constant 1.000000e+00 : f32
    %79 = vector.broadcast %cst_31 : f32 to vector<8x384xf32>
    %80 = arith.addf %78, %79 : vector<8x384xf32>
    %cst_32 = arith.constant 5.000000e-01 : f32
    %81 = vector.broadcast %cst_32 : f32 to vector<8x384xf32>
    %82 = arith.mulf %81, %80 : vector<8x384xf32>
    %83 = vector.extract_strided_slice %82 {offsets = [0, 0], sizes = [8, 128], strides = [1, 1]} : vector<8x384xf32> to vector<8x128xf32>
    %84 = vector.extract_strided_slice %82 {offsets = [0, 128], sizes = [8, 128], strides = [1, 1]} : vector<8x384xf32> to vector<8x128xf32>
    %85 = vector.extract_strided_slice %82 {offsets = [0, 256], sizes = [8, 128], strides = [1, 1]} : vector<8x384xf32> to vector<8x128xf32>
    %86 = vector.extract_strided_slice %74 {offsets = [0, 384], sizes = [8, 128], strides = [1, 1]} : vector<8x512xf32> to vector<8x128xf32>
    %87 = math.tanh %86 : vector<8x128xf32>
    %88 = arith.mulf %84, %69 : vector<8x128xf32>
    %89 = arith.mulf %83, %87 : vector<8x128xf32>
    %90 = arith.addf %88, %89 : vector<8x128xf32>
    %91 = math.tanh %90 : vector<8x128xf32>
    %92 = arith.mulf %85, %91 : vector<8x128xf32>
    %c32 = arith.constant 32 : index
    %c0_33 = arith.constant 0 : index
    %93 = vector.load %arg12[%c32, %c0_33] : memref<64x512xf32, #tpu.memory_space<vmem>>, vector<8x512xf32>
    %cst_34 = arith.constant dense<0.000000e+00> : vector<8x512xf32>
    %94 = tpu.matmul %92, %13, %cst_34 {dimension_numbers = #tpu.dot_dimension_numbers<[1], [0], [0], [1], [0, 0, 1, 1], [], []>} : vector<8x128xf32>, vector<128x512xf32>, vector<8x512xf32> -> vector<8x512xf32>
    %95 = arith.addf %93, %94 : vector<8x512xf32>
    %96 = vector.extract_strided_slice %95 {offsets = [0, 0], sizes = [8, 384], strides = [1, 1]} : vector<8x512xf32> to vector<8x384xf32>
    %cst_35 = arith.constant 5.000000e-01 : f32
    %97 = vector.broadcast %cst_35 : f32 to vector<8x384xf32>
    %98 = arith.mulf %97, %96 : vector<8x384xf32>
    %99 = math.tanh %98 : vector<8x384xf32>
    %cst_36 = arith.constant 1.000000e+00 : f32
    %100 = vector.broadcast %cst_36 : f32 to vector<8x384xf32>
    %101 = arith.addf %99, %100 : vector<8x384xf32>
    %cst_37 = arith.constant 5.000000e-01 : f32
    %102 = vector.broadcast %cst_37 : f32 to vector<8x384xf32>
    %103 = arith.mulf %102, %101 : vector<8x384xf32>
    %104 = vector.extract_strided_slice %103 {offsets = [0, 0], sizes = [8, 128], strides = [1, 1]} : vector<8x384xf32> to vector<8x128xf32>
    %105 = vector.extract_strided_slice %103 {offsets = [0, 128], sizes = [8, 128], strides = [1, 1]} : vector<8x384xf32> to vector<8x128xf32>
    %106 = vector.extract_strided_slice %103 {offsets = [0, 256], sizes = [8, 128], strides = [1, 1]} : vector<8x384xf32> to vector<8x128xf32>
    %107 = vector.extract_strided_slice %95 {offsets = [0, 384], sizes = [8, 128], strides = [1, 1]} : vector<8x512xf32> to vector<8x128xf32>
    %108 = math.tanh %107 : vector<8x128xf32>
    %109 = arith.mulf %105, %90 : vector<8x128xf32>
    %110 = arith.mulf %104, %108 : vector<8x128xf32>
    %111 = arith.addf %109, %110 : vector<8x128xf32>
    %112 = math.tanh %111 : vector<8x128xf32>
    %113 = arith.mulf %106, %112 : vector<8x128xf32>
    %c40 = arith.constant 40 : index
    %c0_38 = arith.constant 0 : index
    %114 = vector.load %arg12[%c40, %c0_38] : memref<64x512xf32, #tpu.memory_space<vmem>>, vector<8x512xf32>
    %cst_39 = arith.constant dense<0.000000e+00> : vector<8x512xf32>
    %115 = tpu.matmul %113, %13, %cst_39 {dimension_numbers = #tpu.dot_dimension_numbers<[1], [0], [0], [1], [0, 0, 1, 1], [], []>} : vector<8x128xf32>, vector<128x512xf32>, vector<8x512xf32> -> vector<8x512xf32>
    %116 = arith.addf %114, %115 : vector<8x512xf32>
    %117 = vector.extract_strided_slice %116 {offsets = [0, 0], sizes = [8, 384], strides = [1, 1]} : vector<8x512xf32> to vector<8x384xf32>
    %cst_40 = arith.constant 5.000000e-01 : f32
    %118 = vector.broadcast %cst_40 : f32 to vector<8x384xf32>
    %119 = arith.mulf %118, %117 : vector<8x384xf32>
    %120 = math.tanh %119 : vector<8x384xf32>
    %cst_41 = arith.constant 1.000000e+00 : f32
    %121 = vector.broadcast %cst_41 : f32 to vector<8x384xf32>
    %122 = arith.addf %120, %121 : vector<8x384xf32>
    %cst_42 = arith.constant 5.000000e-01 : f32
    %123 = vector.broadcast %cst_42 : f32 to vector<8x384xf32>
    %124 = arith.mulf %123, %122 : vector<8x384xf32>
    %125 = vector.extract_strided_slice %124 {offsets = [0, 0], sizes = [8, 128], strides = [1, 1]} : vector<8x384xf32> to vector<8x128xf32>
    %126 = vector.extract_strided_slice %124 {offsets = [0, 128], sizes = [8, 128], strides = [1, 1]} : vector<8x384xf32> to vector<8x128xf32>
    %127 = vector.extract_strided_slice %124 {offsets = [0, 256], sizes = [8, 128], strides = [1, 1]} : vector<8x384xf32> to vector<8x128xf32>
    %128 = vector.extract_strided_slice %116 {offsets = [0, 384], sizes = [8, 128], strides = [1, 1]} : vector<8x512xf32> to vector<8x128xf32>
    %129 = math.tanh %128 : vector<8x128xf32>
    %130 = arith.mulf %126, %111 : vector<8x128xf32>
    %131 = arith.mulf %125, %129 : vector<8x128xf32>
    %132 = arith.addf %130, %131 : vector<8x128xf32>
    %133 = math.tanh %132 : vector<8x128xf32>
    %134 = arith.mulf %127, %133 : vector<8x128xf32>
    %c48 = arith.constant 48 : index
    %c0_43 = arith.constant 0 : index
    %135 = vector.load %arg12[%c48, %c0_43] : memref<64x512xf32, #tpu.memory_space<vmem>>, vector<8x512xf32>
    %cst_44 = arith.constant dense<0.000000e+00> : vector<8x512xf32>
    %136 = tpu.matmul %134, %13, %cst_44 {dimension_numbers = #tpu.dot_dimension_numbers<[1], [0], [0], [1], [0, 0, 1, 1], [], []>} : vector<8x128xf32>, vector<128x512xf32>, vector<8x512xf32> -> vector<8x512xf32>
    %137 = arith.addf %135, %136 : vector<8x512xf32>
    %138 = vector.extract_strided_slice %137 {offsets = [0, 0], sizes = [8, 384], strides = [1, 1]} : vector<8x512xf32> to vector<8x384xf32>
    %cst_45 = arith.constant 5.000000e-01 : f32
    %139 = vector.broadcast %cst_45 : f32 to vector<8x384xf32>
    %140 = arith.mulf %139, %138 : vector<8x384xf32>
    %141 = math.tanh %140 : vector<8x384xf32>
    %cst_46 = arith.constant 1.000000e+00 : f32
    %142 = vector.broadcast %cst_46 : f32 to vector<8x384xf32>
    %143 = arith.addf %141, %142 : vector<8x384xf32>
    %cst_47 = arith.constant 5.000000e-01 : f32
    %144 = vector.broadcast %cst_47 : f32 to vector<8x384xf32>
    %145 = arith.mulf %144, %143 : vector<8x384xf32>
    %146 = vector.extract_strided_slice %145 {offsets = [0, 0], sizes = [8, 128], strides = [1, 1]} : vector<8x384xf32> to vector<8x128xf32>
    %147 = vector.extract_strided_slice %145 {offsets = [0, 128], sizes = [8, 128], strides = [1, 1]} : vector<8x384xf32> to vector<8x128xf32>
    %148 = vector.extract_strided_slice %145 {offsets = [0, 256], sizes = [8, 128], strides = [1, 1]} : vector<8x384xf32> to vector<8x128xf32>
    %149 = vector.extract_strided_slice %137 {offsets = [0, 384], sizes = [8, 128], strides = [1, 1]} : vector<8x512xf32> to vector<8x128xf32>
    %150 = math.tanh %149 : vector<8x128xf32>
    %151 = arith.mulf %147, %132 : vector<8x128xf32>
    %152 = arith.mulf %146, %150 : vector<8x128xf32>
    %153 = arith.addf %151, %152 : vector<8x128xf32>
    %154 = math.tanh %153 : vector<8x128xf32>
    %155 = arith.mulf %148, %154 : vector<8x128xf32>
    %c56 = arith.constant 56 : index
    %c0_48 = arith.constant 0 : index
    %156 = vector.load %arg12[%c56, %c0_48] : memref<64x512xf32, #tpu.memory_space<vmem>>, vector<8x512xf32>
    %cst_49 = arith.constant dense<0.000000e+00> : vector<8x512xf32>
    %157 = tpu.matmul %155, %13, %cst_49 {dimension_numbers = #tpu.dot_dimension_numbers<[1], [0], [0], [1], [0, 0, 1, 1], [], []>} : vector<8x128xf32>, vector<128x512xf32>, vector<8x512xf32> -> vector<8x512xf32>
    %158 = arith.addf %156, %157 : vector<8x512xf32>
    %159 = vector.extract_strided_slice %158 {offsets = [0, 0], sizes = [8, 384], strides = [1, 1]} : vector<8x512xf32> to vector<8x384xf32>
    %cst_50 = arith.constant 5.000000e-01 : f32
    %160 = vector.broadcast %cst_50 : f32 to vector<8x384xf32>
    %161 = arith.mulf %160, %159 : vector<8x384xf32>
    %162 = math.tanh %161 : vector<8x384xf32>
    %cst_51 = arith.constant 1.000000e+00 : f32
    %163 = vector.broadcast %cst_51 : f32 to vector<8x384xf32>
    %164 = arith.addf %162, %163 : vector<8x384xf32>
    %cst_52 = arith.constant 5.000000e-01 : f32
    %165 = vector.broadcast %cst_52 : f32 to vector<8x384xf32>
    %166 = arith.mulf %165, %164 : vector<8x384xf32>
    %167 = vector.extract_strided_slice %166 {offsets = [0, 0], sizes = [8, 128], strides = [1, 1]} : vector<8x384xf32> to vector<8x128xf32>
    %168 = vector.extract_strided_slice %166 {offsets = [0, 128], sizes = [8, 128], strides = [1, 1]} : vector<8x384xf32> to vector<8x128xf32>
    %169 = vector.extract_strided_slice %166 {offsets = [0, 256], sizes = [8, 128], strides = [1, 1]} : vector<8x384xf32> to vector<8x128xf32>
    %170 = vector.extract_strided_slice %158 {offsets = [0, 384], sizes = [8, 128], strides = [1, 1]} : vector<8x512xf32> to vector<8x128xf32>
    %171 = math.tanh %170 : vector<8x128xf32>
    %172 = arith.mulf %168, %153 : vector<8x128xf32>
    %173 = arith.mulf %167, %171 : vector<8x128xf32>
    %174 = arith.addf %172, %173 : vector<8x128xf32>
    %175 = math.tanh %174 : vector<8x128xf32>
    %176 = arith.mulf %169, %175 : vector<8x128xf32>
    %c3_i32 = arith.constant 3 : i32
    %177 = arith.cmpi slt, %arg0, %c3_i32 : i32
    %178 = arith.extui %177 : i1 to i32
    %c0_i32_53 = arith.constant 0 : i32
    %179 = arith.cmpi ne, %178, %c0_i32_53 : i32
    scf.if %179 {
      %183 = tpu.concatenate %29, %50, %71, %92, %113, %134, %155, %176 in 0 : vector<8x128xf32>, vector<8x128xf32>, vector<8x128xf32>, vector<8x128xf32>, vector<8x128xf32>, vector<8x128xf32>, vector<8x128xf32>, vector<8x128xf32> -> vector<64x128xf32>
      %c0_56 = arith.constant 0 : index
      %c0_57 = arith.constant 0 : index
      %184 = vector.load %arg11[%c0_56, %c0_57] : memref<64x128xf32, #tpu.memory_space<vmem>>, vector<64x128xf32>
      tpu.vector_store %arg11[%c0_56, %c0_57], %183 {strides = array<i32>} : memref<64x128xf32, #tpu.memory_space<vmem>>, vector<64x128xf32>,
    } else {
    }
    %c3_i32_54 = arith.constant 3 : i32
    %180 = arith.cmpi eq, %arg0, %c3_i32_54 : i32
    %181 = arith.extui %180 : i1 to i32
    %c0_i32_55 = arith.constant 0 : i32
    %182 = arith.cmpi ne, %181, %c0_i32_55 : i32
    scf.if %182 {
      %c0_56 = arith.constant 0 : index
      %c0_57 = arith.constant 0 : index
      %183 = vector.load %arg5[%c0_56, %c0_57] : memref<128x128xf32, #tpu.memory_space<vmem>>, vector<128x128xf32>
      %cst_58 = arith.constant dense<0.000000e+00> : vector<8x128xf32>
      %184 = tpu.matmul %176, %183, %cst_58 {dimension_numbers = #tpu.dot_dimension_numbers<[1], [0], [0], [1], [0, 0, 1, 1], [], []>} : vector<8x128xf32>, vector<128x128xf32>, vector<8x128xf32> -> vector<8x128xf32>
      %c0_59 = arith.constant 0 : index
      %c0_60 = arith.constant 0 : index
      %185 = vector.load %arg6[%c0_59, %c0_60] : memref<1x128xf32, #tpu.memory_space<vmem>>, vector<1x128xf32>
      %186 = vector.broadcast %185 : vector<1x128xf32> to vector<8x128xf32>
      %187 = arith.addf %184, %186 : vector<8x128xf32>
      %c0_61 = arith.constant 0 : index
      %c0_62 = arith.constant 0 : index
      %188 = vector.load %arg9[%c0_61, %c0_62] : memref<8x128xf32, #tpu.memory_space<vmem>>, vector<8x128xf32>
      tpu.vector_store %arg9[%c0_61, %c0_62], %187 {strides = array<i32>} : memref<8x128xf32, #tpu.memory_space<vmem>>, vector<8x128xf32>,
      %c0_63 = arith.constant 0 : index
      %c0_64 = arith.constant 0 : index
      %189 = vector.load %arg7[%c0_63, %c0_64] : memref<128x128xf32, #tpu.memory_space<vmem>>, vector<128x128xf32>
      %cst_65 = arith.constant dense<0.000000e+00> : vector<8x128xf32>
      %190 = tpu.matmul %187, %189, %cst_65 {dimension_numbers = #tpu.dot_dimension_numbers<[1], [0], [0], [1], [0, 0, 1, 1], [], []>} : vector<8x128xf32>, vector<128x128xf32>, vector<8x128xf32> -> vector<8x128xf32>
      %c0_66 = arith.constant 0 : index
      %c0_67 = arith.constant 0 : index
      %191 = vector.load %arg8[%c0_66, %c0_67] : memref<1x128xf32, #tpu.memory_space<vmem>>, vector<1x128xf32>
      %192 = vector.broadcast %191 : vector<1x128xf32> to vector<8x128xf32>
      %193 = arith.addf %190, %192 : vector<8x128xf32>
      %c0_68 = arith.constant 0 : index
      %c0_69 = arith.constant 0 : index
      %194 = vector.load %arg10[%c0_68, %c0_69] : memref<8x128xf32, #tpu.memory_space<vmem>>, vector<8x128xf32>
      tpu.vector_store %arg10[%c0_68, %c0_69], %193 {strides = array<i32>} : memref<8x128xf32, #tpu.memory_space<vmem>>, vector<8x128xf32>,
    } else {
    }
    return
  }
  func.func @transform_0(%arg0: i32) -> (i32, i32) {
    %c0_i32 = arith.constant 0 : i32
    %c0_i32_0 = arith.constant 0 : i32
    %c0_i32_1 = arith.constant 0 : i32
    return %c0_i32, %c0_i32_0 : i32, i32
  }
  func.func @transform_1(%arg0: i32) -> (i32, i32, i32) {
    %c0_i32 = arith.constant 0 : i32
    %c0_i32_0 = arith.constant 0 : i32
    %c0_i32_1 = arith.constant 0 : i32
    return %arg0, %c0_i32, %c0_i32_0 : i32, i32, i32
  }
  func.func @transform_2(%arg0: i32) -> (i32, i32, i32) {
    %c0_i32 = arith.constant 0 : i32
    %c0_i32_0 = arith.constant 0 : i32
    %c0_i32_1 = arith.constant 0 : i32
    return %arg0, %c0_i32, %c0_i32_0 : i32, i32, i32
  }
  func.func @transform_3(%arg0: i32) -> (i32, i32, i32) {
    %c0_i32 = arith.constant 0 : i32
    %c0_i32_0 = arith.constant 0 : i32
    %c0_i32_1 = arith.constant 0 : i32
    return %arg0, %c0_i32, %c0_i32_0 : i32, i32, i32
  }
  func.func @transform_4(%arg0: i32) -> (i32, i32) {
    %c0_i32 = arith.constant 0 : i32
    %c0_i32_0 = arith.constant 0 : i32
    %c0_i32_1 = arith.constant 0 : i32
    return %c0_i32, %c0_i32_0 : i32, i32
  }
  func.func @transform_5(%arg0: i32) -> (i32, i32) {
    %c0_i32 = arith.constant 0 : i32
    %c0_i32_0 = arith.constant 0 : i32
    %c0_i32_1 = arith.constant 0 : i32
    return %c0_i32, %c0_i32_0 : i32, i32
  }
  func.func @transform_6(%arg0: i32) -> (i32, i32) {
    %c0_i32 = arith.constant 0 : i32
    %c0_i32_0 = arith.constant 0 : i32
    %c0_i32_1 = arith.constant 0 : i32
    return %c0_i32, %c0_i32_0 : i32, i32
  }
  func.func @transform_7(%arg0: i32) -> (i32, i32) {
    %c0_i32 = arith.constant 0 : i32
    %c0_i32_0 = arith.constant 0 : i32
    %c0_i32_1 = arith.constant 0 : i32
    return %c0_i32, %c0_i32_0 : i32, i32
  }
  func.func @transform_8(%arg0: i32) -> (i32, i32) {
    %c0_i32 = arith.constant 0 : i32
    %c0_i32_0 = arith.constant 0 : i32
    %c0_i32_1 = arith.constant 0 : i32
    return %c0_i32, %c0_i32_0 : i32, i32
  }
  func.func @transform_9(%arg0: i32) -> (i32, i32) {
    %c0_i32 = arith.constant 0 : i32
    %c0_i32_0 = arith.constant 0 : i32
    %c0_i32_1 = arith.constant 0 : i32
    return %c0_i32, %c0_i32_0 : i32, i32
  }
}

</mosaic_0001>

<llo_original>
// kernel: tpu_custom_call.1
$region0: #{tpu_custom_call.1}
  #allocation0 [shape = 'u32[]', space=smem, size = 0x4, offset = 0x4, fixed_abs, tag = 'smem constant byte address 0x4 - core index']
  #allocation1 [shape = 'u32[144,128]{1,0:T(1,128)}', space=vmem, size = 0x12000, scoped, tag = 'internal scratch']
  #allocation2 [shape = 'f32[64,128]{1,0:T(8,128)}', space=vmem, size = 0x8000, scoped, tag = 'scratch operand']
  #allocation3 [shape = 'f32[64,512]{1,0:T(8,128)}', space=vmem, size = 0x20000, scoped, tag = 'scratch operand']
  %s0 = inlined_call_operand.hbm [shape: f32[64,128], index: 0, kind: input, shape index: {}]
  %s1 = inlined_call_operand.hbm [shape: f32[4,128,512], index: 1, kind: input, shape index: {}]
  %s2 = inlined_call_operand.hbm [shape: f32[4,128,512], index: 2, kind: input, shape index: {}]
  %s3 = inlined_call_operand.hbm [shape: f32[4,1,512], index: 3, kind: input, shape index: {}]
  %s4 = inlined_call_operand.hbm [shape: f32[128,128], index: 4, kind: input, shape index: {}]
  %s5 = inlined_call_operand.vmem [shape: f32[1,128], index: 5, kind: input, shape index: {}]
  %s6 = inlined_call_operand.hbm [shape: f32[128,128], index: 6, kind: input, shape index: {}]
  %s7 = inlined_call_operand.vmem [shape: f32[1,128], index: 7, kind: input, shape index: {}]
  %s8 = inlined_call_operand.hbm [shape: f32[8,128], index: 8, kind: output, shape index: {0}]
  %s9 = inlined_call_operand.hbm [shape: f32[8,128], index: 9, kind: output, shape index: {1}]
  %10 = xla_tuple %s8, %s9
  %s11 = sld [smem:[#allocation0]]
  $region109: #{tpu_custom_call.1} parent=0
    _
  %s13 = ssub.s32 1, %s11
  %s14 = scalar_select 0, %s13, %s11
  $region1: #{tpu_custom_call.1} parent=0
    #allocation4 [shape = 'u8[32768]{0}', space=vmem, size = 0x8000, scoped, tag = 'input window, operand 0, single buffered']
    #allocation5 [shape = 's32[2]{0}', space=sflag, size = 0x8, scoped, tag = 'scoped memory for tpu_custom_call.1']
    #allocation6 [shape = 's32[2]{0}', space=sflag, size = 0x8, scoped, tag = 'scoped memory for tpu_custom_call.1']
    #allocation7 [shape = 'u8[524288]{0}', space=vmem, size = 0x80000, scoped, tag = 'input window, operand 1']
    #allocation8 [shape = 's32[2]{0}', space=sflag, size = 0x8, scoped, tag = 'scoped memory for tpu_custom_call.1']
    #allocation9 [shape = 'u8[524288]{0}', space=vmem, size = 0x80000, scoped, tag = 'input window, operand 2']
    #allocation10 [shape = 'u8[4096]{0}', space=vmem, size = 0x1000, scoped, tag = 'input window, operand 3']
    #allocation11 [shape = 's32[2]{0}', space=sflag, size = 0x8, scoped, tag = 'scoped memory for tpu_custom_call.1']
    #allocation12 [shape = 'u8[65536]{0}', space=vmem, size = 0x10000, scoped, tag = 'input window, operand 4, single buffered']
    #allocation13 [shape = 'u8[65536]{0}', space=vmem, size = 0x10000, scoped, tag = 'input window, operand 6, single buffered']
    #allocation14 [shape = 's32[1]{0}', space=sflag, size = 0x4, scoped, tag = 'scoped memory for tpu_custom_call.1']
    #allocation15 [shape = 'u8[4096]{0}', space=vmem, size = 0x1000, scoped, tag = 'output window, operand 0, single buffered']
    #allocation16 [shape = 'u8[4096]{0}', space=vmem, size = 0x1000, scoped, tag = 'output window, operand 1, single buffered']
    #allocation17 [shape = 's32[1]{0}', space=sflag, size = 0x4, scoped, tag = 'scoped memory for tpu_custom_call.1']
    %15 = vsyncpa [#allocation5], 0
    %16 = vsyncpa [#allocation8], 0
    %s17 = scalar_lea.sflag [#allocation8], 1
    %18 = vsyncpa %s17, 0
    %19 = vsyncpa [#allocation11], 0
    %s20 = scalar_lea.sflag [#allocation11], 1
    %21 = vsyncpa %s20, 0
    %22 = vsyncpa [#allocation14], 0
    %23 = vsyncpa [#allocation6], 0
    %24 = vsyncpa [#allocation17], 0
    loop: start=0, step=1, limit=6
    $region2: #{tpu_custom_call.1} parent=1 // loop_pre_header
      _
    $region3: #{tpu_custom_call.1} parent=1 // loop_header
      %s26 = sphi 0, %s30
      %p27 = scmp.ge.s32.totalorder %s26, 6
      %s34 = sphi 0, %s34
      %s36 = sphi 0, %s34
      %s37 = sphi 0, %s36
      %s51 = sphi 0, %s37
      %s57 = sphi 0, %s59
      %s60 = sphi 0, %s57
      %s61 = sphi 0, %s60
      %s77 = sphi 0, %s61
      %s83 = sphi 0, %s85
      %s86 = sphi 0, %s83
      %s87 = sphi 0, %s86
      %s103 = sphi 0, %s87
      %s109 = sphi 0, %s111
      %s112 = sphi 0, %s109
      %s113 = sphi 0, %s112
      %s129 = sphi 0, %s113
      %s133 = sphi 0, %s133
      %s135 = sphi 0, %s133
      %s136 = sphi 0, %s135
      %s150 = sphi 0, %s136
      %s154 = sphi 0, %s154
      %s156 = sphi 0, %s154
      %s157 = sphi 0, %s156
      %s171 = sphi 0, %s157
      %s175 = sphi 0, %s175
      %s177 = sphi 0, %s175
      %s178 = sphi 0, %s177
      %s192 = sphi 0, %s178
      %s196 = sphi 0, %s196
      %s198 = sphi 0, %s196
      %s199 = sphi 0, %s198
      %s213 = sphi 0, %s199
      %s217 = sphi 0, %s217
      %s219 = sphi 0, %s217
      %s220 = sphi 0, %s219
      %s234 = sphi 0, %s220
      %s238 = sphi 0, %s238
      %s240 = sphi 0, %s238
      %s241 = sphi 0, %s240
      %s255 = sphi 0, %s241
    $region4: #{tpu_custom_call.1} parent=1 // loop_header_branch
      %29 = sbr.rel (%p27) target = $region8
    $region5: #{tpu_custom_call.1} parent=1 // loop_body
      %s31 = ssub.s32 %s26, 1
      %s32 = ssub.s32 %s26, 2
      %s33 = sadd.s32 %s26, 1
      %s35 = sadd.s32 %s34, 1
      %p38 = scmp.eq.s32.totalorder %s26, 3
      %p39 = scmp.ne.s32.totalorder %s34, %s36
      %p40 = scmp.eq.s32.totalorder %s26, 0
      %p41 = por %p39, %p40
      %p42 = scmp.ne.s32.totalorder %s34, %s36
      %p43 = scmp.eq.s32.totalorder %s31, 3
      %p44 = por %p42, %p43
      %p45 = scmp.ne.s32.totalorder %s36, %s37
      %p46 = scmp.eq.s32.totalorder %s31, 0
      %p47 = por %p45, %p46
      %p48 = scmp.ne.s32.totalorder %s36, %s37
      %p49 = scmp.eq.s32.totalorder %s32, 3
      %p50 = por %p48, %p49
      %p52 = scmp.ne.s32.totalorder %s37, %s51
      %p53 = scmp.eq.s32.totalorder %s32, 0
      %p54 = por %p52, %p53
      %s55 = ssub.s32 %s26, %s33
      %p56 = scmp.eq.s32.totalorder %s55, 0
      %s58 = sadd.s32 %s57, 1
      %s59 = scalar_select %p56, %s57, %s58
      %p62 = pneg %p56
      %p63 = scmp.eq.s32.totalorder %s26, 3
      %p64 = por %p62, %p63
      %p65 = scmp.ne.s32.totalorder %s57, %s60
      %p66 = scmp.eq.s32.totalorder %s26, 0
      %p67 = por %p65, %p66
      %p68 = scmp.ne.s32.totalorder %s57, %s60
      %p69 = scmp.eq.s32.totalorder %s31, 3
      %p70 = por %p68, %p69
      %p71 = scmp.ne.s32.totalorder %s60, %s61
      %p72 = scmp.eq.s32.totalorder %s31, 0
      %p73 = por %p71, %p72
      %p74 = scmp.ne.s32.totalorder %s60, %s61
      %p75 = scmp.eq.s32.totalorder %s32, 3
      %p76 = por %p74, %p75
      %p78 = scmp.ne.s32.totalorder %s61, %s77
      %p79 = scmp.eq.s32.totalorder %s32, 0
      %p80 = por %p78, %p79
      %s81 = ssub.s32 %s26, %s33
      %p82 = scmp.eq.s32.totalorder %s81, 0
      %s84 = sadd.s32 %s83, 1
      %s85 = scalar_select %p82, %s83, %s84
      %p88 = pneg %p82
      %p89 = scmp.eq.s32.totalorder %s26, 3
      %p90 = por %p88, %p89
      %p91 = scmp.ne.s32.totalorder %s83, %s86
      %p92 = scmp.eq.s32.totalorder %s26, 0
      %p93 = por %p91, %p92
      %p94 = scmp.ne.s32.totalorder %s83, %s86
      %p95 = scmp.eq.s32.totalorder %s31, 3
      %p96 = por %p94, %p95
      %p97 = scmp.ne.s32.totalorder %s86, %s87
      %p98 = scmp.eq.s32.totalorder %s31, 0
      %p99 = por %p97, %p98
      %p100 = scmp.ne.s32.totalorder %s86, %s87
      %p101 = scmp.eq.s32.totalorder %s32, 3
      %p102 = por %p100, %p101
      %p104 = scmp.ne.s32.totalorder %s87, %s103
      %p105 = scmp.eq.s32.totalorder %s32, 0
      %p106 = por %p104, %p105
      %s107 = ssub.s32 %s26, %s33
      %p108 = scmp.eq.s32.totalorder %s107, 0
      %s110 = sadd.s32 %s109, 1
      %s111 = scalar_select %p108, %s109, %s110
      %p114 = pneg %p108
      %p115 = scmp.eq.s32.totalorder %s26, 3
      %p116 = por %p114, %p115
      %p117 = scmp.ne.s32.totalorder %s109, %s112
      %p118 = scmp.eq.s32.totalorder %s26, 0
      %p119 = por %p117, %p118
      %p120 = scmp.ne.s32.totalorder %s109, %s112
      %p121 = scmp.eq.s32.totalorder %s31, 3
      %p122 = por %p120, %p121
      %p123 = scmp.ne.s32.totalorder %s112, %s113
      %p124 = scmp.eq.s32.totalorder %s31, 0
      %p125 = por %p123, %p124
      %p126 = scmp.ne.s32.totalorder %s112, %s113
      %p127 = scmp.eq.s32.totalorder %s32, 3
      %p128 = por %p126, %p127
      %p130 = scmp.ne.s32.totalorder %s113, %s129
      %p131 = scmp.eq.s32.totalorder %s32, 0
      %p132 = por %p130, %p131
      %s134 = sadd.s32 %s133, 1
      %p137 = scmp.eq.s32.totalorder %s26, 3
      %p138 = scmp.ne.s32.totalorder %s133, %s135
      %p139 = scmp.eq.s32.totalorder %s26, 0
      %p140 = por %p138, %p139
      %p141 = scmp.ne.s32.totalorder %s133, %s135
      %p142 = scmp.eq.s32.totalorder %s31, 3
      %p143 = por %p141, %p142
      %p144 = scmp.ne.s32.totalorder %s135, %s136
      %p145 = scmp.eq.s32.totalorder %s31, 0
      %p146 = por %p144, %p145
      %p147 = scmp.ne.s32.totalorder %s135, %s136
      %p148 = scmp.eq.s32.totalorder %s32, 3
      %p149 = por %p147, %p148
      %p151 = scmp.ne.s32.totalorder %s136, %s150
      %p152 = scmp.eq.s32.totalorder %s32, 0
      %p153 = por %p151, %p152
      %s155 = sadd.s32 %s154, 1
      %p158 = scmp.eq.s32.totalorder %s26, 3
      %p159 = scmp.ne.s32.totalorder %s154, %s156
      %p160 = scmp.eq.s32.totalorder %s26, 0
      %p161 = por %p159, %p160
      %p162 = scmp.ne.s32.totalorder %s154, %s156
      %p163 = scmp.eq.s32.totalorder %s31, 3
      %p164 = por %p162, %p163
      %p165 = scmp.ne.s32.totalorder %s156, %s157
      %p166 = scmp.eq.s32.totalorder %s31, 0
      %p167 = por %p165, %p166
      %p168 = scmp.ne.s32.totalorder %s156, %s157
      %p169 = scmp.eq.s32.totalorder %s32, 3
      %p170 = por %p168, %p169
      %p172 = scmp.ne.s32.totalorder %s157, %s171
      %p173 = scmp.eq.s32.totalorder %s32, 0
      %p174 = por %p172, %p173
      %s176 = sadd.s32 %s175, 1
      %p179 = scmp.eq.s32.totalorder %s26, 3
      %p180 = scmp.ne.s32.totalorder %s175, %s177
      %p181 = scmp.eq.s32.totalorder %s26, 0
      %p182 = por %p180, %p181
      %p183 = scmp.ne.s32.totalorder %s175, %s177
      %p184 = scmp.eq.s32.totalorder %s31, 3
      %p185 = por %p183, %p184
      %p186 = scmp.ne.s32.totalorder %s177, %s178
      %p187 = scmp.eq.s32.totalorder %s31, 0
      %p188 = por %p186, %p187
      %p189 = scmp.ne.s32.totalorder %s177, %s178
      %p190 = scmp.eq.s32.totalorder %s32, 3
      %p191 = por %p189, %p190
      %p193 = scmp.ne.s32.totalorder %s178, %s192
      %p194 = scmp.eq.s32.totalorder %s32, 0
      %p195 = por %p193, %p194
      %s197 = sadd.s32 %s196, 1
      %p200 = scmp.eq.s32.totalorder %s26, 3
      %p201 = scmp.ne.s32.totalorder %s196, %s198
      %p202 = scmp.eq.s32.totalorder %s26, 0
      %p203 = por %p201, %p202
      %p204 = scmp.ne.s32.totalorder %s196, %s198
      %p205 = scmp.eq.s32.totalorder %s31, 3
      %p206 = por %p204, %p205
      %p207 = scmp.ne.s32.totalorder %s198, %s199
      %p208 = scmp.eq.s32.totalorder %s31, 0
      %p209 = por %p207, %p208
      %p210 = scmp.ne.s32.totalorder %s198, %s199
      %p211 = scmp.eq.s32.totalorder %s32, 3
      %p212 = por %p210, %p211
      %p214 = scmp.ne.s32.totalorder %s199, %s213
      %p215 = scmp.eq.s32.totalorder %s32, 0
      %p216 = por %p214, %p215
      %s218 = sadd.s32 %s217, 1
      %p221 = scmp.eq.s32.totalorder %s26, 3
      %p222 = scmp.ne.s32.totalorder %s217, %s219
      %p223 = scmp.eq.s32.totalorder %s26, 0
      %p224 = por %p222, %p223
      %p225 = scmp.ne.s32.totalorder %s217, %s219
      %p226 = scmp.eq.s32.totalorder %s31, 3
      %p227 = por %p225, %p226
      %p228 = scmp.ne.s32.totalorder %s219, %s220
      %p229 = scmp.eq.s32.totalorder %s31, 0
      %p230 = por %p228, %p229
      %p231 = scmp.ne.s32.totalorder %s219, %s220
      %p232 = scmp.eq.s32.totalorder %s32, 3
      %p233 = por %p231, %p232
      %p235 = scmp.ne.s32.totalorder %s220, %s234
      %p236 = scmp.eq.s32.totalorder %s32, 0
      %p237 = por %p235, %p236
      %s239 = sadd.s32 %s238, 1
      %p242 = scmp.eq.s32.totalorder %s26, 3
      %p243 = scmp.ne.s32.totalorder %s238, %s240
      %p244 = scmp.eq.s32.totalorder %s26, 0
      %p245 = por %p243, %p244
      %p246 = scmp.ne.s32.totalorder %s238, %s240
      %p247 = scmp.eq.s32.totalorder %s31, 3
      %p248 = por %p246, %p247
      %p249 = scmp.ne.s32.totalorder %s240, %s241
      %p250 = scmp.eq.s32.totalorder %s31, 0
      %p251 = por %p249, %p250
      %p252 = scmp.ne.s32.totalorder %s240, %s241
      %p253 = scmp.eq.s32.totalorder %s32, 3
      %p254 = por %p252, %p253
      %p256 = scmp.ne.s32.totalorder %s241, %s255
      %p257 = scmp.eq.s32.totalorder %s32, 0
      %p258 = por %p256, %p257
      %p259 = scmp.le.s32.totalorder 1, %s26
      %p260 = scmp.lt.s32.totalorder %s26, 5
      %p261 = pnand %p259, %p260
      %p262 = pneg %p261
      // Predicated region
      $region9: #{tpu_custom_call.1} parent=5 // pred_check
        _
      $region10: #{tpu_custom_call.1} parent=5 // pred_check_branch
        %264 = sbr.rel (%p261) target = $region12
      $region11: #{tpu_custom_call.1} parent=5 // pred_region
        %s265 = ssub.s32 %s26, 1
        // Predicated region
        $region13: #{tpu_custom_call.1} parent=11 // pred_check
          %p266 = pneg %p47
        $region14: #{tpu_custom_call.1} parent=11 // pred_check_branch
          %268 = sbr.rel (%p266) target = $region16
        $region15: #{tpu_custom_call.1} parent=11 // pred_region
          %s270 = ssub.s32 1024, 1024
          %271 = vsyncadd [#allocation5], %s270
          %s272 = sshll.u32 [#allocation4], 4
          %s273 = int_to_ptr.vmem [resolvable:$true] %s272
          %278 = dma.hbm_to_vmem [thread:$0]  %s0, 1024, %s273, [#allocation5], 128, 128, 8
        $region16: #{tpu_custom_call.1} parent=11 // pred_fallthru
          _
        // Predicated region
        $region17: #{tpu_custom_call.1} parent=11 // pred_check
          %p279 = pneg %p146
        $region18: #{tpu_custom_call.1} parent=11 // pred_check_branch
          %281 = sbr.rel (%p279) target = $region20
        $region19: #{tpu_custom_call.1} parent=11 // pred_region
          %s283 = ssub.s32 2048, 2048
          %284 = vsyncadd [#allocation11], %s283
          %s285 = sshll.u32 [#allocation12], 4
          %s286 = int_to_ptr.vmem [resolvable:$true] %s285
          %291 = dma.hbm_to_vmem [thread:$0]  %s4, 2048, %s286, [#allocation11], 128, 128, 8
        $region20: #{tpu_custom_call.1} parent=11 // pred_fallthru
          _
        // Predicated region
        $region21: #{tpu_custom_call.1} parent=11 // pred_check
          %p292 = pneg %p167
        $region22: #{tpu_custom_call.1} parent=11 // pred_check_branch
          %294 = sbr.rel (%p292) target = $region24
        $region23: #{tpu_custom_call.1} parent=11 // pred_region
          _
        $region24: #{tpu_custom_call.1} parent=11 // pred_fallthru
          _
        // Predicated region
        $region25: #{tpu_custom_call.1} parent=11 // pred_check
          %p295 = pneg %p188
        $region26: #{tpu_custom_call.1} parent=11 // pred_check_branch
          %297 = sbr.rel (%p295) target = $region28
        $region27: #{tpu_custom_call.1} parent=11 // pred_region
          %s299 = ssub.s32 2048, 2048
          %300 = vsyncadd [#allocation14], %s299
          %s301 = sshll.u32 [#allocation13], 4
          %s302 = int_to_ptr.vmem [resolvable:$true] %s301
          %307 = dma.hbm_to_vmem [thread:$0]  %s6, 2048, %s302, [#allocation14], 128, 128, 8
        $region28: #{tpu_custom_call.1} parent=11 // pred_fallthru
          _
        // Predicated region
        $region29: #{tpu_custom_call.1} parent=11 // pred_check
          %p308 = pneg %p209
        $region30: #{tpu_custom_call.1} parent=11 // pred_check_branch
          %310 = sbr.rel (%p308) target = $region32
        $region31: #{tpu_custom_call.1} parent=11 // pred_region
          _
        $region32: #{tpu_custom_call.1} parent=11 // pred_fallthru
          _
      $region12: #{tpu_custom_call.1} parent=5 // pred_fallthru
        _
      %p311 = scmp.lt.s32.totalorder %s26, 4
      // Predicated region
      $region33: #{tpu_custom_call.1} parent=5 // pred_check
        %p312 = pneg %p311
      $region34: #{tpu_custom_call.1} parent=5 // pred_check_branch
        %314 = sbr.rel (%p312) target = $region36
      $region35: #{tpu_custom_call.1} parent=5 // pred_region
        // Predicated region
        $region37: #{tpu_custom_call.1} parent=35 // pred_check
          %p315 = pneg %p67
        $region38: #{tpu_custom_call.1} parent=35 // pred_check_branch
          %317 = sbr.rel (%p315) target = $region40
        $region39: #{tpu_custom_call.1} parent=35 // pred_region
          %s318 = sand.u32 %s26, 1
          %s319 = scalar_lea.sflag [#allocation8], %s318
          %s320 = sand.u32 %s57, 1
          %s321 = smul.addr %s320, 512
          %s322 = scalar_lea.vmem [#allocation7], %s321
          %s324 = ssub.s32 8192, 8192
          %325 = vsyncadd %s319, %s324
          %s326 = smul.addr %s26, 64
          %s327 = smul.addr %s326, 128
          %s328 = scalar_lea.hbm %s1, %s327
          %s329 = sshll.u32 %s322, 4
          %s330 = int_to_ptr.vmem [resolvable:$true] %s329
          %335 = dma.hbm_to_vmem [thread:$0]  %s328, 8192, %s330, %s319, 512, 512, 32
        $region40: #{tpu_custom_call.1} parent=35 // pred_fallthru
          _
        // Predicated region
        $region41: #{tpu_custom_call.1} parent=35 // pred_check
          %p336 = pneg %p93
        $region42: #{tpu_custom_call.1} parent=35 // pred_check_branch
          %338 = sbr.rel (%p336) target = $region44
        $region43: #{tpu_custom_call.1} parent=35 // pred_region
          %s339 = sand.u32 %s26, 1
          %s340 = scalar_lea.sflag [#allocation8], %s339
          %s341 = sand.u32 %s83, 1
          %s342 = smul.addr %s341, 512
          %s343 = scalar_lea.vmem [#allocation9], %s342
          %s345 = ssub.s32 8192, 8192
          %346 = vsyncadd %s340, %s345
          %s347 = smul.addr %s26, 64
          %s348 = smul.addr %s347, 128
          %s349 = scalar_lea.hbm %s2, %s348
          %s350 = sshll.u32 %s343, 4
          %s351 = int_to_ptr.vmem [resolvable:$true] %s350
          %356 = dma.hbm_to_vmem [thread:$0]  %s349, 8192, %s351, %s340, 512, 512, 32
        $region44: #{tpu_custom_call.1} parent=35 // pred_fallthru
          _
        // Predicated region
        $region45: #{tpu_custom_call.1} parent=35 // pred_check
          %p357 = pneg %p119
        $region46: #{tpu_custom_call.1} parent=35 // pred_check_branch
          %359 = sbr.rel (%p357) target = $region48
        $region47: #{tpu_custom_call.1} parent=35 // pred_region
          %s360 = sand.u32 %s26, 1
          %s361 = scalar_lea.sflag [#allocation11], %s360
          %s362 = sand.u32 %s109, 1
          %s363 = smul.addr %s362, 4
          %s364 = scalar_lea.vmem [#allocation10], %s363
          %s366 = ssub.s32 64, 64
          %367 = vsyncadd %s361, %s366
          %s368 = smul.addr %s26, 4
          %s369 = smul.addr %s368, 16
          %s370 = scalar_lea.hbm %s3, %s369
          %s372 = sshll.u32 %s364, 4
          %s373 = int_to_ptr.vmem [resolvable:$true] %s372
          %375 = dma.hbm_to_vmem [thread:$0]  %s370, 64, %s373, %s361
        $region48: #{tpu_custom_call.1} parent=35 // pred_fallthru
          _
      $region36: #{tpu_custom_call.1} parent=5 // pred_fallthru
        _
      %p376 = scmp.le.s32.totalorder 1, %s26
      %p377 = scmp.lt.s32.totalorder %s26, 5
      %p378 = pnand %p376, %p377
      %p379 = pneg %p378
      // Predicated region
      $region49: #{tpu_custom_call.1} parent=5 // pred_check
        _
      $region50: #{tpu_custom_call.1} parent=5 // pred_check_branch
        %381 = sbr.rel (%p378) target = $region52
      $region51: #{tpu_custom_call.1} parent=5 // pred_region
        %s382 = ssub.s32 %s26, 1
        // Predicated region
        $region53: #{tpu_custom_call.1} parent=51 // pred_check
          %p383 = pneg %p47
        $region54: #{tpu_custom_call.1} parent=51 // pred_check_branch
          %385 = sbr.rel (%p383) target = $region56
        $region55: #{tpu_custom_call.1} parent=51 // pred_region
          %386 = dma.done [#allocation5], 1024
        $region56: #{tpu_custom_call.1} parent=51 // pred_fallthru
          _
        %s387 = sand.u32 %s31, 1
        %s388 = scalar_lea.sflag [#allocation8], %s387
        %s389 = sand.u32 %s60, 1
        %s390 = smul.addr %s389, 512
        %s391 = scalar_lea.vmem [#allocation7], %s390
        // Predicated region
        $region57: #{tpu_custom_call.1} parent=51 // pred_check
          %p392 = pneg %p73
        $region58: #{tpu_custom_call.1} parent=51 // pred_check_branch
          %394 = sbr.rel (%p392) target = $region60
        $region59: #{tpu_custom_call.1} parent=51 // pred_region
          %395 = dma.done %s388, 8192
        $region60: #{tpu_custom_call.1} parent=51 // pred_fallthru
          _
        %s396 = sand.u32 %s31, 1
        %s397 = scalar_lea.sflag [#allocation8], %s396
        %s398 = sand.u32 %s86, 1
        %s399 = smul.addr %s398, 512
        %s400 = scalar_lea.vmem [#allocation9], %s399
        // Predicated region
        $region61: #{tpu_custom_call.1} parent=51 // pred_check
          %p401 = pneg %p99
        $region62: #{tpu_custom_call.1} parent=51 // pred_check_branch
          %403 = sbr.rel (%p401) target = $region64
        $region63: #{tpu_custom_call.1} parent=51 // pred_region
          %404 = dma.done %s397, 8192
        $region64: #{tpu_custom_call.1} parent=51 // pred_fallthru
          _
        %s405 = sand.u32 %s31, 1
        %s406 = scalar_lea.sflag [#allocation11], %s405
        %s407 = sand.u32 %s112, 1
        %s408 = smul.addr %s407, 4
        %s409 = scalar_lea.vmem [#allocation10], %s408
        // Predicated region
        $region65: #{tpu_custom_call.1} parent=51 // pred_check
          %p410 = pneg %p125
        $region66: #{tpu_custom_call.1} parent=51 // pred_check_branch
          %412 = sbr.rel (%p410) target = $region68
        $region67: #{tpu_custom_call.1} parent=51 // pred_region
          %413 = dma.done %s406, 64
        $region68: #{tpu_custom_call.1} parent=51 // pred_fallthru
          _
        // Predicated region
        $region69: #{tpu_custom_call.1} parent=51 // pred_check
          %p414 = pneg %p146
        $region70: #{tpu_custom_call.1} parent=51 // pred_check_branch
          %416 = sbr.rel (%p414) target = $region72
        $region71: #{tpu_custom_call.1} parent=51 // pred_region
          %417 = dma.done [#allocation11], 2048
        $region72: #{tpu_custom_call.1} parent=51 // pred_fallthru
          _
        // Predicated region
        $region73: #{tpu_custom_call.1} parent=51 // pred_check
          %p418 = pneg %p188
        $region74: #{tpu_custom_call.1} parent=51 // pred_check_branch
          %420 = sbr.rel (%p418) target = $region76
        $region75: #{tpu_custom_call.1} parent=51 // pred_region
          %421 = dma.done [#allocation14], 2048
        $region76: #{tpu_custom_call.1} parent=51 // pred_fallthru
          _
        %p422 = pneg %p47
        %p423 = pneg %p44
        %s424 = sand.u32 %s31, 1
        %s425 = scalar_lea.sflag [#allocation8], %s424
        %s426 = sand.u32 %s60, 1
        %s427 = smul.addr %s426, 512
        %s428 = scalar_lea.vmem [#allocation7], %s427
        %p429 = pneg %p73
        %p430 = pneg %p70
        %s431 = sand.u32 %s31, 1
        %s432 = scalar_lea.sflag [#allocation8], %s431
        %s433 = sand.u32 %s86, 1
        %s434 = smul.addr %s433, 512
        %s435 = scalar_lea.vmem [#allocation9], %s434
        %p436 = pneg %p99
        %p437 = pneg %p96
        %s438 = sand.u32 %s31, 1
        %s439 = scalar_lea.sflag [#allocation11], %s438
        %s440 = sand.u32 %s112, 1
        %s441 = smul.addr %s440, 4
        %s442 = scalar_lea.vmem [#allocation10], %s441
        %p443 = pneg %p125
        %p444 = pneg %p122
        %p445 = pneg %p146
        %p446 = pneg %p143
        %p447 = pneg %p167
        %p448 = pneg %p164
        %p449 = pneg %p188
        %p450 = pneg %p185
        %p451 = pneg %p209
        %p452 = pneg %p206
        %p453 = pneg %p230
        %p454 = pneg %p227
        %p455 = pneg %p251
        %p456 = pneg %p248
        %p457 = scmp.eq.s32.totalorder %s31, 0
        // Predicated region
        $region77: #{tpu_custom_call.1} parent=51 // pred_check
          %p458 = pneg %p457
        $region78: #{tpu_custom_call.1} parent=51 // pred_check_branch
          %460 = sbr.rel (%p458) target = $region80
        $region79: #{tpu_custom_call.1} parent=51 // pred_region
          %v461 = vld [vmem:[#allocation4] sm:$0xff]
          %v462 = vld [vmem:[#allocation4 + $0x8] sm:$0xff]
          %v463 = vld [vmem:[#allocation4 + $0x10] sm:$0xff]
          %v464 = vld [vmem:[#allocation4 + $0x18] sm:$0xff]
          %v465 = vld [vmem:[#allocation4 + $0x20] sm:$0xff]
          %v466 = vld [vmem:[#allocation4 + $0x28] sm:$0xff]
          %v467 = vld [vmem:[#allocation4 + $0x30] sm:$0xff]
          %v468 = vld [vmem:[#allocation4 + $0x38] sm:$0xff]
          %469 = vst [vmem:[#allocation2] sm:$0xff] %v461
          %470 = vst [vmem:[#allocation2 + $0x8] sm:$0xff] %v462
          %471 = vst [vmem:[#allocation2 + $0x10] sm:$0xff] %v463
          %472 = vst [vmem:[#allocation2 + $0x18] sm:$0xff] %v464
          %473 = vst [vmem:[#allocation2 + $0x20] sm:$0xff] %v465
          %474 = vst [vmem:[#allocation2 + $0x28] sm:$0xff] %v466
          %475 = vst [vmem:[#allocation2 + $0x30] sm:$0xff] %v467
          %476 = vst [vmem:[#allocation2 + $0x38] sm:$0xff] %v468
        $region80: #{tpu_custom_call.1} parent=51 // pred_fallthru
          _
        %v477 = vld [vmem:[#allocation2] sm:$0xff]
        %v478 = vld [vmem:[#allocation2 + $0x8] sm:$0xff]
        %v479 = vld [vmem:[#allocation2 + $0x10] sm:$0xff]
        %v480 = vld [vmem:[#allocation2 + $0x18] sm:$0xff]
        %v481 = vld [vmem:[#allocation2 + $0x20] sm:$0xff]
        %v482 = vld [vmem:[#allocation2 + $0x28] sm:$0xff]
        %v483 = vld [vmem:[#allocation2 + $0x30] sm:$0xff]
        %v484 = vld [vmem:[#allocation2 + $0x38] sm:$0xff]
        %v485 = vld [vmem:[%s391] sm:$0xff]
        %v486 = vld [vmem:[%s391 + $0x8] sm:$0xff]
        %v487 = vld [vmem:[%s391 + $0x10] sm:$0xff]
        %v488 = vld [vmem:[%s391 + $0x18] sm:$0xff]
        %v489 = vld [vmem:[%s391 + $0x20] sm:$0xff]
        %v490 = vld [vmem:[%s391 + $0x28] sm:$0xff]
        %v491 = vld [vmem:[%s391 + $0x30] sm:$0xff]
        %v492 = vld [vmem:[%s391 + $0x38] sm:$0xff]
        %v493 = vld [vmem:[%s391 + $0x40] sm:$0xff]
        %v494 = vld [vmem:[%s391 + $0x48] sm:$0xff]
        %v495 = vld [vmem:[%s391 + $0x50] sm:$0xff]
        %v496 = vld [vmem:[%s391 + $0x58] sm:$0xff]
        %v497 = vld [vmem:[%s391 + $0x60] sm:$0xff]
        %v498 = vld [vmem:[%s391 + $0x68] sm:$0xff]
        %v499 = vld [vmem:[%s391 + $0x70] sm:$0xff]
        %v500 = vld [vmem:[%s391 + $0x78] sm:$0xff]
        %v501 = vld [vmem:[%s391 + $0x80] sm:$0xff]
        %v502 = vld [vmem:[%s391 + $0x88] sm:$0xff]
        %v503 = vld [vmem:[%s391 + $0x90] sm:$0xff]
        %v504 = vld [vmem:[%s391 + $0x98] sm:$0xff]
        %v505 = vld [vmem:[%s391 + $0xa0] sm:$0xff]
        %v506 = vld [vmem:[%s391 + $0xa8] sm:$0xff]
        %v507 = vld [vmem:[%s391 + $0xb0] sm:$0xff]
        %v508 = vld [vmem:[%s391 + $0xb8] sm:$0xff]
        %v509 = vld [vmem:[%s391 + $0xc0] sm:$0xff]
        %v510 = vld [vmem:[%s391 + $0xc8] sm:$0xff]
        %v511 = vld [vmem:[%s391 + $0xd0] sm:$0xff]
        %v512 = vld [vmem:[%s391 + $0xd8] sm:$0xff]
        %v513 = vld [vmem:[%s391 + $0xe0] sm:$0xff]
        %v514 = vld [vmem:[%s391 + $0xe8] sm:$0xff]
        %v515 = vld [vmem:[%s391 + $0xf0] sm:$0xff]
        %v516 = vld [vmem:[%s391 + $0xf8] sm:$0xff]
        %v517 = vld [vmem:[%s391 + $0x100] sm:$0xff]
        %v518 = vld [vmem:[%s391 + $0x108] sm:$0xff]
        %v519 = vld [vmem:[%s391 + $0x110] sm:$0xff]
        %v520 = vld [vmem:[%s391 + $0x118] sm:$0xff]
        %v521 = vld [vmem:[%s391 + $0x120] sm:$0xff]
        %v522 = vld [vmem:[%s391 + $0x128] sm:$0xff]
        %v523 = vld [vmem:[%s391 + $0x130] sm:$0xff]
        %v524 = vld [vmem:[%s391 + $0x138] sm:$0xff]
        %v525 = vld [vmem:[%s391 + $0x140] sm:$0xff]
        %v526 = vld [vmem:[%s391 + $0x148] sm:$0xff]
        %v527 = vld [vmem:[%s391 + $0x150] sm:$0xff]
        %v528 = vld [vmem:[%s391 + $0x158] sm:$0xff]
        %v529 = vld [vmem:[%s391 + $0x160] sm:$0xff]
        %v530 = vld [vmem:[%s391 + $0x168] sm:$0xff]
        %v531 = vld [vmem:[%s391 + $0x170] sm:$0xff]
        %v532 = vld [vmem:[%s391 + $0x178] sm:$0xff]
        %v533 = vld [vmem:[%s391 + $0x180] sm:$0xff]
        %v534 = vld [vmem:[%s391 + $0x188] sm:$0xff]
        %v535 = vld [vmem:[%s391 + $0x190] sm:$0xff]
        %v536 = vld [vmem:[%s391 + $0x198] sm:$0xff]
        %v537 = vld [vmem:[%s391 + $0x1a0] sm:$0xff]
        %v538 = vld [vmem:[%s391 + $0x1a8] sm:$0xff]
        %v539 = vld [vmem:[%s391 + $0x1b0] sm:$0xff]
        %v540 = vld [vmem:[%s391 + $0x1b8] sm:$0xff]
        %v541 = vld [vmem:[%s391 + $0x1c0] sm:$0xff]
        %v542 = vld [vmem:[%s391 + $0x1c8] sm:$0xff]
        %v543 = vld [vmem:[%s391 + $0x1d0] sm:$0xff]
        %v544 = vld [vmem:[%s391 + $0x1d8] sm:$0xff]
        %v545 = vld [vmem:[%s391 + $0x1e0] sm:$0xff]
        %v546 = vld [vmem:[%s391 + $0x1e8] sm:$0xff]
        %v547 = vld [vmem:[%s391 + $0x1f0] sm:$0xff]
        %v548 = vld [vmem:[%s391 + $0x1f8] sm:$0xff]
        %v549 = vld [vmem:[%s409] sm:$0xf]
        %v551 = vlaneseq
        %v552 = vshrl.u32 %v551, 7
        %v553 = vsub.s32 0, %v552
        %v554 = vrot.slane %v549, %v553
        %v555 = vlaneseq
        %v556 = vshrl.u32 %v555, 7
        %v557 = vsub.s32 1, %v556
        %v558 = vrot.slane %v549, %v557
        %v559 = vlaneseq
        %v560 = vshrl.u32 %v559, 7
        %v561 = vsub.s32 2, %v560
        %v562 = vrot.slane %v549, %v561
        %v563 = vlaneseq
        %v564 = vshrl.u32 %v563, 7
        %v565 = vsub.s32 3, %v564
        %v566 = vrot.slane %v549, %v565
        %571 = vmatprep.subr.mxu0 %v546
        %572 = vmatpush1.msra.mxu0 %v545
        %573 = vmatprep.subr.mxu0 %v542
        %574 = vmatpush1.msra.mxu0 %v541
        %575 = vmatprep.subr.mxu0 %v538
        %576 = vmatpush1.msra.mxu0 %v537
        %577 = vmatprep.subr.mxu0 %v534
        %578 = vmatpush1.msra.mxu0 %v533
        %579 = vmatprep.subr.mxu0 %v530
        %580 = vmatpush1.msra.mxu0 %v529
        %581 = vmatprep.subr.mxu0 %v526
        %582 = vmatpush1.msra.mxu0 %v525
        %583 = vmatprep.subr.mxu0 %v522
        %584 = vmatpush1.msra.mxu0 %v521
        %585 = vmatprep.subr.mxu0 %v518
        %586 = vmatpush1.msra.mxu0 %v517
        %587 = vmatprep.subr.mxu0 %v514
        %588 = vmatpush1.msra.mxu0 %v513
        %589 = vmatprep.subr.mxu0 %v510
        %590 = vmatpush1.msra.mxu0 %v509
        %591 = vmatprep.subr.mxu0 %v506
        %592 = vmatpush1.msra.mxu0 %v505
        %593 = vmatprep.subr.mxu0 %v502
        %594 = vmatpush1.msra.mxu0 %v501
        %595 = vmatprep.subr.mxu0 %v498
        %596 = vmatpush1.msra.mxu0 %v497
        %597 = vmatprep.subr.mxu0 %v494
        %598 = vmatpush1.msra.mxu0 %v493
        %599 = vmatprep.subr.mxu0 %v490
        %600 = vmatpush1.msra.mxu0 %v489
        %601 = vmatprep.subr.mxu0 %v486
        %602 = vmatpush1.msra.mxu0 %v485
        %603 = vmatprep.subr.mxu0 0.0
        %604 = vmatpush2.msra.mxu0 0.0
        %605 = vmatprep.subr.mxu0 0.0
        %606 = vmatpush2.msra.mxu0 0.0
        %607 = vmatprep.subr.mxu0 0.0
        %608 = vmatpush2.msra.mxu0 0.0
        %609 = vmatprep.subr.mxu0 0.0
        %610 = vmatpush2.msra.mxu0 0.0
        %611 = vmatprep.subr.mxu0 0.0
        %612 = vmatpush2.msra.mxu0 0.0
        %613 = vmatprep.subr.mxu0 0.0
        %614 = vmatpush2.msra.mxu0 0.0
        %615 = vmatprep.subr.mxu0 0.0
        %616 = vmatpush2.msra.mxu0 0.0
        %617 = vmatprep.subr.mxu0 0.0
        %618 = vmatpush2.msra.mxu0 0.0
        %619 = vmatprep.subr.mxu0 0.0
        %620 = vmatpush2.msra.mxu0 0.0
        %621 = vmatprep.subr.mxu0 0.0
        %622 = vmatpush2.msra.mxu0 0.0
        %623 = vmatprep.subr.mxu0 0.0
        %624 = vmatpush2.msra.mxu0 0.0
        %625 = vmatprep.subr.mxu0 0.0
        %626 = vmatpush2.msra.mxu0 0.0
        %627 = vmatprep.subr.mxu0 0.0
        %628 = vmatpush2.msra.mxu0 0.0
        %629 = vmatprep.subr.mxu0 0.0
        %630 = vmatpush2.msra.mxu0 0.0
        %631 = vmatprep.subr.mxu0 0.0
        %632 = vmatpush2.msra.mxu0 0.0
        %633 = vmatprep.subr.mxu0 0.0
        %634 = vmatpush2.msra.mxu0 0.0
        %635 = vmatprep.mubr.f32.mxu0 0.0
        %636 = vmatmul.mubr.f32.gmra.mxu0 %v477
        %v637 = vpop.f32.mrf.mxu0
        %v638 = vadd.f32 %v554, %v637
        %v639 = vpop.f32.mrf.mxu0
        %v640 = vadd.f32 %v558, %v639
        %641 = vmatprep.mubr.f32.mxu0 0.0
        %642 = vmatmul.mubr.f32.gmra.mxu0 %v478
        %v643 = vpop.f32.mrf.mxu0
        %v644 = vadd.f32 %v554, %v643
        %v645 = vpop.f32.mrf.mxu0
        %v646 = vadd.f32 %v558, %v645
        %647 = vmatprep.mubr.f32.mxu0 0.0
        %648 = vmatmul.mubr.f32.gmra.mxu0 %v479
        %v649 = vpop.f32.mrf.mxu0
        %v650 = vadd.f32 %v554, %v649
        %v651 = vpop.f32.mrf.mxu0
        %v652 = vadd.f32 %v558, %v651
        %653 = vmatprep.mubr.f32.mxu0 0.0
        %654 = vmatmul.mubr.f32.gmra.mxu0 %v480
        %v655 = vpop.f32.mrf.mxu0
        %v656 = vadd.f32 %v554, %v655
        %v657 = vpop.f32.mrf.mxu0
        %v658 = vadd.f32 %v558, %v657
        %659 = vmatprep.mubr.f32.mxu0 0.0
        %660 = vmatmul.mubr.f32.gmra.mxu0 %v481
        %v661 = vpop.f32.mrf.mxu0
        %v662 = vadd.f32 %v554, %v661
        %v663 = vpop.f32.mrf.mxu0
        %v664 = vadd.f32 %v558, %v663
        %665 = vmatprep.mubr.f32.mxu0 0.0
        %666 = vmatmul.mubr.f32.gmra.mxu0 %v482
        %v667 = vpop.f32.mrf.mxu0
        %v668 = vadd.f32 %v554, %v667
        %v669 = vpop.f32.mrf.mxu0
        %v670 = vadd.f32 %v558, %v669
        %671 = vmatprep.mubr.f32.mxu0 0.0
        %672 = vmatmul.mubr.f32.gmra.mxu0 %v483
        %v673 = vpop.f32.mrf.mxu0
        %v674 = vadd.f32 %v554, %v673
        %v675 = vpop.f32.mrf.mxu0
        %v676 = vadd.f32 %v558, %v675
        %677 = vmatprep.mubr.f32.mxu0 0.0
        %678 = vmatmul.mubr.f32.gmra.mxu0 %v484
        %v679 = vpop.f32.mrf.mxu0
        %v680 = vadd.f32 %v554, %v679
        %v681 = vpop.f32.mrf.mxu0
        %v682 = vadd.f32 %v558, %v681
        %683 = vdwg.mxu0
        %684 = vmatprep.subr.mxu0 %v548
        %685 = vmatpush1.msra.mxu0 %v547
        %686 = vmatprep.subr.mxu0 %v544
        %687 = vmatpush1.msra.mxu0 %v543
        %688 = vmatprep.subr.mxu0 %v540
        %689 = vmatpush1.msra.mxu0 %v539
        %690 = vmatprep.subr.mxu0 %v536
        %691 = vmatpush1.msra.mxu0 %v535
        %692 = vmatprep.subr.mxu0 %v532
        %693 = vmatpush1.msra.mxu0 %v531
        %694 = vmatprep.subr.mxu0 %v528
        %695 = vmatpush1.msra.mxu0 %v527
        %696 = vmatprep.subr.mxu0 %v524
        %697 = vmatpush1.msra.mxu0 %v523
        %698 = vmatprep.subr.mxu0 %v520
        %699 = vmatpush1.msra.mxu0 %v519
        %700 = vmatprep.subr.mxu0 %v516
        %701 = vmatpush1.msra.mxu0 %v515
        %702 = vmatprep.subr.mxu0 %v512
        %703 = vmatpush1.msra.mxu0 %v511
        %704 = vmatprep.subr.mxu0 %v508
        %705 = vmatpush1.msra.mxu0 %v507
        %706 = vmatprep.subr.mxu0 %v504
        %707 = vmatpush1.msra.mxu0 %v503
        %708 = vmatprep.subr.mxu0 %v500
        %709 = vmatpush1.msra.mxu0 %v499
        %710 = vmatprep.subr.mxu0 %v496
        %711 = vmatpush1.msra.mxu0 %v495
        %712 = vmatprep.subr.mxu0 %v492
        %713 = vmatpush1.msra.mxu0 %v491
        %714 = vmatprep.subr.mxu0 %v488
        %715 = vmatpush1.msra.mxu0 %v487
        %716 = vmatprep.subr.mxu0 0.0
        %717 = vmatpush2.msra.mxu0 0.0
        %718 = vmatprep.subr.mxu0 0.0
        %719 = vmatpush2.msra.mxu0 0.0
        %720 = vmatprep.subr.mxu0 0.0
        %721 = vmatpush2.msra.mxu0 0.0
        %722 = vmatprep.subr.mxu0 0.0
        %723 = vmatpush2.msra.mxu0 0.0
        %724 = vmatprep.subr.mxu0 0.0
        %725 = vmatpush2.msra.mxu0 0.0
        %726 = vmatprep.subr.mxu0 0.0
        %727 = vmatpush2.msra.mxu0 0.0
        %728 = vmatprep.subr.mxu0 0.0
        %729 = vmatpush2.msra.mxu0 0.0
        %730 = vmatprep.subr.mxu0 0.0
        %731 = vmatpush2.msra.mxu0 0.0
        %732 = vmatprep.subr.mxu0 0.0
        %733 = vmatpush2.msra.mxu0 0.0
        %734 = vmatprep.subr.mxu0 0.0
        %735 = vmatpush2.msra.mxu0 0.0
        %736 = vmatprep.subr.mxu0 0.0
        %737 = vmatpush2.msra.mxu0 0.0
        %738 = vmatprep.subr.mxu0 0.0
        %739 = vmatpush2.msra.mxu0 0.0
        %740 = vmatprep.subr.mxu0 0.0
        %741 = vmatpush2.msra.mxu0 0.0
        %742 = vmatprep.subr.mxu0 0.0
        %743 = vmatpush2.msra.mxu0 0.0
        %744 = vmatprep.subr.mxu0 0.0
        %745 = vmatpush2.msra.mxu0 0.0
        %746 = vmatprep.subr.mxu0 0.0
        %747 = vmatpush2.msra.mxu0 0.0
        %748 = vmatprep.mubr.f32.mxu0 0.0
        %749 = vmatmul.mubr.f32.gmra.mxu0 %v477
        %v750 = vpop.f32.mrf.mxu0
        %v751 = vadd.f32 %v562, %v750
        %v752 = vpop.f32.mrf.mxu0
        %v753 = vadd.f32 %v566, %v752
        %754 = vmatprep.mubr.f32.mxu0 0.0
        %755 = vmatmul.mubr.f32.gmra.mxu0 %v478
        %v756 = vpop.f32.mrf.mxu0
        %v757 = vadd.f32 %v562, %v756
        %v758 = vpop.f32.mrf.mxu0
        %v759 = vadd.f32 %v566, %v758
        %760 = vmatprep.mubr.f32.mxu0 0.0
        %761 = vmatmul.mubr.f32.gmra.mxu0 %v479
        %v762 = vpop.f32.mrf.mxu0
        %v763 = vadd.f32 %v562, %v762
        %v764 = vpop.f32.mrf.mxu0
        %v765 = vadd.f32 %v566, %v764
        %766 = vmatprep.mubr.f32.mxu0 0.0
        %767 = vmatmul.mubr.f32.gmra.mxu0 %v480
        %v768 = vpop.f32.mrf.mxu0
        %v769 = vadd.f32 %v562, %v768
        %v770 = vpop.f32.mrf.mxu0
        %v771 = vadd.f32 %v566, %v770
        %772 = vmatprep.mubr.f32.mxu0 0.0
        %773 = vmatmul.mubr.f32.gmra.mxu0 %v481
        %v774 = vpop.f32.mrf.mxu0
        %v775 = vadd.f32 %v562, %v774
        %v776 = vpop.f32.mrf.mxu0
        %v777 = vadd.f32 %v566, %v776
        %778 = vmatprep.mubr.f32.mxu0 0.0
        %779 = vmatmul.mubr.f32.gmra.mxu0 %v482
        %v780 = vpop.f32.mrf.mxu0
        %v781 = vadd.f32 %v562, %v780
        %v782 = vpop.f32.mrf.mxu0
        %v783 = vadd.f32 %v566, %v782
        %784 = vmatprep.mubr.f32.mxu0 0.0
        %785 = vmatmul.mubr.f32.gmra.mxu0 %v483
        %v786 = vpop.f32.mrf.mxu0
        %v787 = vadd.f32 %v562, %v786
        %v788 = vpop.f32.mrf.mxu0
        %v789 = vadd.f32 %v566, %v788
        %790 = vmatprep.mubr.f32.mxu0 0.0
        %791 = vmatmul.mubr.f32.gmra.mxu0 %v484
        %v792 = vpop.f32.mrf.mxu0
        %v793 = vadd.f32 %v562, %v792
        %v794 = vpop.f32.mrf.mxu0
        %v795 = vadd.f32 %v566, %v794
        %796 = vdwg.mxu0
        %797 = vst [vmem:[#allocation3] sm:$0xff] %v638
        %798 = vst [vmem:[#allocation3 + $0x8] sm:$0xff] %v640
        %799 = vst [vmem:[#allocation3 + $0x10] sm:$0xff] %v751
        %800 = vst [vmem:[#allocation3 + $0x18] sm:$0xff] %v753
        %801 = vst [vmem:[#allocation3 + $0x20] sm:$0xff] %v644
        %802 = vst [vmem:[#allocation3 + $0x28] sm:$0xff] %v646
        %803 = vst [vmem:[#allocation3 + $0x30] sm:$0xff] %v757
        %804 = vst [vmem:[#allocation3 + $0x38] sm:$0xff] %v759
        %805 = vst [vmem:[#allocation3 + $0x40] sm:$0xff] %v650
        %806 = vst [vmem:[#allocation3 + $0x48] sm:$0xff] %v652
        %807 = vst [vmem:[#allocation3 + $0x50] sm:$0xff] %v763
        %808 = vst [vmem:[#allocation3 + $0x58] sm:$0xff] %v765
        %809 = vst [vmem:[#allocation3 + $0x60] sm:$0xff] %v656
        %810 = vst [vmem:[#allocation3 + $0x68] sm:$0xff] %v658
        %811 = vst [vmem:[#allocation3 + $0x70] sm:$0xff] %v769
        %812 = vst [vmem:[#allocation3 + $0x78] sm:$0xff] %v771
        %813 = vst [vmem:[#allocation3 + $0x80] sm:$0xff] %v662
        %814 = vst [vmem:[#allocation3 + $0x88] sm:$0xff] %v664
        %815 = vst [vmem:[#allocation3 + $0x90] sm:$0xff] %v775
        %816 = vst [vmem:[#allocation3 + $0x98] sm:$0xff] %v777
        %817 = vst [vmem:[#allocation3 + $0xa0] sm:$0xff] %v668
        %818 = vst [vmem:[#allocation3 + $0xa8] sm:$0xff] %v670
        %819 = vst [vmem:[#allocation3 + $0xb0] sm:$0xff] %v781
        %820 = vst [vmem:[#allocation3 + $0xb8] sm:$0xff] %v783
        %821 = vst [vmem:[#allocation3 + $0xc0] sm:$0xff] %v674
        %822 = vst [vmem:[#allocation3 + $0xc8] sm:$0xff] %v676
        %823 = vst [vmem:[#allocation3 + $0xd0] sm:$0xff] %v787
        %824 = vst [vmem:[#allocation3 + $0xd8] sm:$0xff] %v789
        %825 = vst [vmem:[#allocation3 + $0xe0] sm:$0xff] %v680
        %826 = vst [vmem:[#allocation3 + $0xe8] sm:$0xff] %v682
        %827 = vst [vmem:[#allocation3 + $0xf0] sm:$0xff] %v793
        %828 = vst [vmem:[#allocation3 + $0xf8] sm:$0xff] %v795
        %v829 = vld [vmem:[%s400] sm:$0xff]
        %v830 = vld [vmem:[%s400 + $0x8] sm:$0xff]
        %v831 = vld [vmem:[%s400 + $0x10] sm:$0xff]
        %v832 = vld [vmem:[%s400 + $0x18] sm:$0xff]
        %v833 = vld [vmem:[%s400 + $0x20] sm:$0xff]
        %v834 = vld [vmem:[%s400 + $0x28] sm:$0xff]
        %v835 = vld [vmem:[%s400 + $0x30] sm:$0xff]
        %v836 = vld [vmem:[%s400 + $0x38] sm:$0xff]
        %v837 = vld [vmem:[%s400 + $0x40] sm:$0xff]
        %v838 = vld [vmem:[%s400 + $0x48] sm:$0xff]
        %v839 = vld [vmem:[%s400 + $0x50] sm:$0xff]
        %v840 = vld [vmem:[%s400 + $0x58] sm:$0xff]
        %v841 = vld [vmem:[%s400 + $0x60] sm:$0xff]
        %v842 = vld [vmem:[%s400 + $0x68] sm:$0xff]
        %v843 = vld [vmem:[%s400 + $0x70] sm:$0xff]
        %v844 = vld [vmem:[%s400 + $0x78] sm:$0xff]
        %v845 = vld [vmem:[%s400 + $0x80] sm:$0xff]
        %v846 = vld [vmem:[%s400 + $0x88] sm:$0xff]
        %v847 = vld [vmem:[%s400 + $0x90] sm:$0xff]
        %v848 = vld [vmem:[%s400 + $0x98] sm:$0xff]
        %v849 = vld [vmem:[%s400 + $0xa0] sm:$0xff]
        %v850 = vld [vmem:[%s400 + $0xa8] sm:$0xff]
        %v851 = vld [vmem:[%s400 + $0xb0] sm:$0xff]
        %v852 = vld [vmem:[%s400 + $0xb8] sm:$0xff]
        %v853 = vld [vmem:[%s400 + $0xc0] sm:$0xff]
        %v854 = vld [vmem:[%s400 + $0xc8] sm:$0xff]
        %v855 = vld [vmem:[%s400 + $0xd0] sm:$0xff]
        %v856 = vld [vmem:[%s400 + $0xd8] sm:$0xff]
        %v857 = vld [vmem:[%s400 + $0xe0] sm:$0xff]
        %v858 = vld [vmem:[%s400 + $0xe8] sm:$0xff]
        %v859 = vld [vmem:[%s400 + $0xf0] sm:$0xff]
        %v860 = vld [vmem:[%s400 + $0xf8] sm:$0xff]
        %v861 = vld [vmem:[%s400 + $0x100] sm:$0xff]
        %v862 = vld [vmem:[%s400 + $0x108] sm:$0xff]
        %v863 = vld [vmem:[%s400 + $0x110] sm:$0xff]
        %v864 = vld [vmem:[%s400 + $0x118] sm:$0xff]
        %v865 = vld [vmem:[%s400 + $0x120] sm:$0xff]
        %v866 = vld [vmem:[%s400 + $0x128] sm:$0xff]
        %v867 = vld [vmem:[%s400 + $0x130] sm:$0xff]
        %v868 = vld [vmem:[%s400 + $0x138] sm:$0xff]
        %v869 = vld [vmem:[%s400 + $0x140] sm:$0xff]
        %v870 = vld [vmem:[%s400 + $0x148] sm:$0xff]
        %v871 = vld [vmem:[%s400 + $0x150] sm:$0xff]
        %v872 = vld [vmem:[%s400 + $0x158] sm:$0xff]
        %v873 = vld [vmem:[%s400 + $0x160] sm:$0xff]
        %v874 = vld [vmem:[%s400 + $0x168] sm:$0xff]
        %v875 = vld [vmem:[%s400 + $0x170] sm:$0xff]
        %v876 = vld [vmem:[%s400 + $0x178] sm:$0xff]
        %v877 = vld [vmem:[%s400 + $0x180] sm:$0xff]
        %v878 = vld [vmem:[%s400 + $0x188] sm:$0xff]
        %v879 = vld [vmem:[%s400 + $0x190] sm:$0xff]
        %v880 = vld [vmem:[%s400 + $0x198] sm:$0xff]
        %v881 = vld [vmem:[%s400 + $0x1a0] sm:$0xff]
        %v882 = vld [vmem:[%s400 + $0x1a8] sm:$0xff]
        %v883 = vld [vmem:[%s400 + $0x1b0] sm:$0xff]
        %v884 = vld [vmem:[%s400 + $0x1b8] sm:$0xff]
        %v885 = vld [vmem:[%s400 + $0x1c0] sm:$0xff]
        %v886 = vld [vmem:[%s400 + $0x1c8] sm:$0xff]
        %v887 = vld [vmem:[%s400 + $0x1d0] sm:$0xff]
        %v888 = vld [vmem:[%s400 + $0x1d8] sm:$0xff]
        %v889 = vld [vmem:[%s400 + $0x1e0] sm:$0xff]
        %v890 = vld [vmem:[%s400 + $0x1e8] sm:$0xff]
        %v891 = vld [vmem:[%s400 + $0x1f0] sm:$0xff]
        %v892 = vld [vmem:[%s400 + $0x1f8] sm:$0xff]
        %v893 = vld [vmem:[#allocation3] sm:$0xff]
        %v894 = vld [vmem:[#allocation3 + $0x10] sm:$0xff]
        %v895 = vld [vmem:[#allocation3 + $0x18] sm:$0xff]
        %v896 = vmul.f32 %v893, 0.5
        %v897 = vmul.f32 %v894, 0.5
        %v898 = vtanh.pop %v896
        %v899 = vtanh.pop %v897
        %v900 = vadd.f32 %v898, 1.0
        %v901 = vadd.f32 %v899, 1.0
        %v902 = vmul.f32 %v900, 0.5
        %v903 = vmul.f32 %v901, 0.5
        %v904 = vtanh.pop %v895
        %v905 = vmul.f32 %v902, %v904
        %v906 = vtanh.pop %v905
        %v907 = vmul.f32 %v903, %v906
        %v908 = vld [vmem:[#allocation3 + $0x20] sm:$0xff]
        %v909 = vld [vmem:[#allocation3 + $0x28] sm:$0xff]
        %v910 = vld [vmem:[#allocation3 + $0x30] sm:$0xff]
        %v911 = vld [vmem:[#allocation3 + $0x38] sm:$0xff]
        %912 = vmatprep.subr.mxu0 %v890
        %913 = vmatpush1.msra.mxu0 %v889
        %914 = vmatprep.subr.mxu0 %v886
        %915 = vmatpush1.msra.mxu0 %v885
        %916 = vmatprep.subr.mxu0 %v882
        %917 = vmatpush1.msra.mxu0 %v881
        %918 = vmatprep.subr.mxu0 %v878
        %919 = vmatpush1.msra.mxu0 %v877
        %920 = vmatprep.subr.mxu0 %v874
        %921 = vmatpush1.msra.mxu0 %v873
        %922 = vmatprep.subr.mxu0 %v870
        %923 = vmatpush1.msra.mxu0 %v869
        %924 = vmatprep.subr.mxu0 %v866
        %925 = vmatpush1.msra.mxu0 %v865
        %926 = vmatprep.subr.mxu0 %v862
        %927 = vmatpush1.msra.mxu0 %v861
        %928 = vmatprep.subr.mxu0 %v858
        %929 = vmatpush1.msra.mxu0 %v857
        %930 = vmatprep.subr.mxu0 %v854
        %931 = vmatpush1.msra.mxu0 %v853
        %932 = vmatprep.subr.mxu0 %v850
        %933 = vmatpush1.msra.mxu0 %v849
        %934 = vmatprep.subr.mxu0 %v846
        %935 = vmatpush1.msra.mxu0 %v845
        %936 = vmatprep.subr.mxu0 %v842
        %937 = vmatpush1.msra.mxu0 %v841
        %938 = vmatprep.subr.mxu0 %v838
        %939 = vmatpush1.msra.mxu0 %v837
        %940 = vmatprep.subr.mxu0 %v834
        %941 = vmatpush1.msra.mxu0 %v833
        %942 = vmatprep.subr.mxu0 %v830
        %943 = vmatpush1.msra.mxu0 %v829
        %944 = vmatprep.subr.mxu0 0.0
        %945 = vmatpush2.msra.mxu0 0.0
        %946 = vmatprep.subr.mxu0 0.0
        %947 = vmatpush2.msra.mxu0 0.0
        %948 = vmatprep.subr.mxu0 0.0
        %949 = vmatpush2.msra.mxu0 0.0
        %950 = vmatprep.subr.mxu0 0.0
        %951 = vmatpush2.msra.mxu0 0.0
        %952 = vmatprep.subr.mxu0 0.0
        %953 = vmatpush2.msra.mxu0 0.0
        %954 = vmatprep.subr.mxu0 0.0
        %955 = vmatpush2.msra.mxu0 0.0
        %956 = vmatprep.subr.mxu0 0.0
        %957 = vmatpush2.msra.mxu0 0.0
        %958 = vmatprep.subr.mxu0 0.0
        %959 = vmatpush2.msra.mxu0 0.0
        %960 = vmatprep.subr.mxu0 0.0
        %961 = vmatpush2.msra.mxu0 0.0
        %962 = vmatprep.subr.mxu0 0.0
        %963 = vmatpush2.msra.mxu0 0.0
        %964 = vmatprep.subr.mxu0 0.0
        %965 = vmatpush2.msra.mxu0 0.0
        %966 = vmatprep.subr.mxu0 0.0
        %967 = vmatpush2.msra.mxu0 0.0
        %968 = vmatprep.subr.mxu0 0.0
        %969 = vmatpush2.msra.mxu0 0.0
        %970 = vmatprep.subr.mxu0 0.0
        %971 = vmatpush2.msra.mxu0 0.0
        %972 = vmatprep.subr.mxu0 0.0
        %973 = vmatpush2.msra.mxu0 0.0
        %974 = vmatprep.subr.mxu0 0.0
        %975 = vmatpush2.msra.mxu0 0.0
        %976 = vmatprep.mubr.f32.mxu0 0.0
        %977 = vmatmul.mubr.f32.gmra.mxu0 %v907
        %v978 = vpop.f32.mrf.mxu0
        %v979 = vadd.f32 0.0, %v978
        %v980 = vpop.f32.mrf.mxu0
        %v981 = vadd.f32 0.0, %v980
        %982 = vdwg.mxu0
        %983 = vmatprep.subr.mxu0 %v892
        %984 = vmatpush1.msra.mxu0 %v891
        %985 = vmatprep.subr.mxu0 %v888
        %986 = vmatpush1.msra.mxu0 %v887
        %987 = vmatprep.subr.mxu0 %v884
        %988 = vmatpush1.msra.mxu0 %v883
        %989 = vmatprep.subr.mxu0 %v880
        %990 = vmatpush1.msra.mxu0 %v879
        %991 = vmatprep.subr.mxu0 %v876
        %992 = vmatpush1.msra.mxu0 %v875
        %993 = vmatprep.subr.mxu0 %v872
        %994 = vmatpush1.msra.mxu0 %v871
        %995 = vmatprep.subr.mxu0 %v868
        %996 = vmatpush1.msra.mxu0 %v867
        %997 = vmatprep.subr.mxu0 %v864
        %998 = vmatpush1.msra.mxu0 %v863
        %999 = vmatprep.subr.mxu0 %v860
        %1000 = vmatpush1.msra.mxu0 %v859
        %1001 = vmatprep.subr.mxu0 %v856
        %1002 = vmatpush1.msra.mxu0 %v855
        %1003 = vmatprep.subr.mxu0 %v852
        %1004 = vmatpush1.msra.mxu0 %v851
        %1005 = vmatprep.subr.mxu0 %v848
        %1006 = vmatpush1.msra.mxu0 %v847
        %1007 = vmatprep.subr.mxu0 %v844
        %1008 = vmatpush1.msra.mxu0 %v843
        %1009 = vmatprep.subr.mxu0 %v840
        %1010 = vmatpush1.msra.mxu0 %v839
        %1011 = vmatprep.subr.mxu0 %v836
        %1012 = vmatpush1.msra.mxu0 %v835
        %1013 = vmatprep.subr.mxu0 %v832
        %1014 = vmatpush1.msra.mxu0 %v831
        %1015 = vmatprep.subr.mxu0 0.0
        %1016 = vmatpush2.msra.mxu0 0.0
        %1017 = vmatprep.subr.mxu0 0.0
        %1018 = vmatpush2.msra.mxu0 0.0
        %1019 = vmatprep.subr.mxu0 0.0
        %1020 = vmatpush2.msra.mxu0 0.0
        %1021 = vmatprep.subr.mxu0 0.0
        %1022 = vmatpush2.msra.mxu0 0.0
        %1023 = vmatprep.subr.mxu0 0.0
        %1024 = vmatpush2.msra.mxu0 0.0
        %1025 = vmatprep.subr.mxu0 0.0
        %1026 = vmatpush2.msra.mxu0 0.0
        %1027 = vmatprep.subr.mxu0 0.0
        %1028 = vmatpush2.msra.mxu0 0.0
        %1029 = vmatprep.subr.mxu0 0.0
        %1030 = vmatpush2.msra.mxu0 0.0
        %1031 = vmatprep.subr.mxu0 0.0
        %1032 = vmatpush2.msra.mxu0 0.0
        %1033 = vmatprep.subr.mxu0 0.0
        %1034 = vmatpush2.msra.mxu0 0.0
        %1035 = vmatprep.subr.mxu0 0.0
        %1036 = vmatpush2.msra.mxu0 0.0
        %1037 = vmatprep.subr.mxu0 0.0
        %1038 = vmatpush2.msra.mxu0 0.0
        %1039 = vmatprep.subr.mxu0 0.0
        %1040 = vmatpush2.msra.mxu0 0.0
        %1041 = vmatprep.subr.mxu0 0.0
        %1042 = vmatpush2.msra.mxu0 0.0
        %1043 = vmatprep.subr.mxu0 0.0
        %1044 = vmatpush2.msra.mxu0 0.0
        %1045 = vmatprep.subr.mxu0 0.0
        %1046 = vmatpush2.msra.mxu0 0.0
        %1047 = vmatprep.mubr.f32.mxu0 0.0
        %1048 = vmatmul.mubr.f32.gmra.mxu0 %v907
        %v1049 = vpop.f32.mrf.mxu0
        %v1050 = vadd.f32 0.0, %v1049
        %v1051 = vpop.f32.mrf.mxu0
        %v1052 = vadd.f32 0.0, %v1051
        %1053 = vdwg.mxu0
        %v1054 = vadd.f32 %v908, %v979
        %v1055 = vadd.f32 %v909, %v981
        %v1056 = vadd.f32 %v910, %v1050
        %v1057 = vadd.f32 %v911, %v1052
        %v1058 = vmul.f32 %v1054, 0.5
        %v1059 = vmul.f32 %v1055, 0.5
        %v1060 = vmul.f32 %v1056, 0.5
        %v1061 = vtanh.pop %v1058
        %v1062 = vtanh.pop %v1059
        %v1063 = vtanh.pop %v1060
        %v1064 = vadd.f32 %v1061, 1.0
        %v1065 = vadd.f32 %v1062, 1.0
        %v1066 = vadd.f32 %v1063, 1.0
        %v1067 = vmul.f32 %v1064, 0.5
        %v1068 = vmul.f32 %v1065, 0.5
        %v1069 = vmul.f32 %v1066, 0.5
        %v1070 = vtanh.pop %v1057
        %v1071 = vmul.f32 %v1068, %v905
        %v1072 = vmul.f32 %v1067, %v1070
        %v1073 = vadd.f32 %v1071, %v1072
        %v1074 = vtanh.pop %v1073
        %v1075 = vmul.f32 %v1069, %v1074
        %v1076 = vld [vmem:[#allocation3 + $0x40] sm:$0xff]
        %v1077 = vld [vmem:[#allocation3 + $0x48] sm:$0xff]
        %v1078 = vld [vmem:[#allocation3 + $0x50] sm:$0xff]
        %v1079 = vld [vmem:[#allocation3 + $0x58] sm:$0xff]
        %1080 = vmatprep.subr.mxu0 %v890
        %1081 = vmatpush1.msra.mxu0 %v889
        %1082 = vmatprep.subr.mxu0 %v886
        %1083 = vmatpush1.msra.mxu0 %v885
        %1084 = vmatprep.subr.mxu0 %v882
        %1085 = vmatpush1.msra.mxu0 %v881
        %1086 = vmatprep.subr.mxu0 %v878
        %1087 = vmatpush1.msra.mxu0 %v877
        %1088 = vmatprep.subr.mxu0 %v874
        %1089 = vmatpush1.msra.mxu0 %v873
        %1090 = vmatprep.subr.mxu0 %v870
        %1091 = vmatpush1.msra.mxu0 %v869
        %1092 = vmatprep.subr.mxu0 %v866
        %1093 = vmatpush1.msra.mxu0 %v865
        %1094 = vmatprep.subr.mxu0 %v862
        %1095 = vmatpush1.msra.mxu0 %v861
        %1096 = vmatprep.subr.mxu0 %v858
        %1097 = vmatpush1.msra.mxu0 %v857
        %1098 = vmatprep.subr.mxu0 %v854
        %1099 = vmatpush1.msra.mxu0 %v853
        %1100 = vmatprep.subr.mxu0 %v850
        %1101 = vmatpush1.msra.mxu0 %v849
        %1102 = vmatprep.subr.mxu0 %v846
        %1103 = vmatpush1.msra.mxu0 %v845
        %1104 = vmatprep.subr.mxu0 %v842
        %1105 = vmatpush1.msra.mxu0 %v841
        %1106 = vmatprep.subr.mxu0 %v838
        %1107 = vmatpush1.msra.mxu0 %v837
        %1108 = vmatprep.subr.mxu0 %v834
        %1109 = vmatpush1.msra.mxu0 %v833
        %1110 = vmatprep.subr.mxu0 %v830
        %1111 = vmatpush1.msra.mxu0 %v829
        %1112 = vmatprep.subr.mxu0 0.0
        %1113 = vmatpush2.msra.mxu0 0.0
        %1114 = vmatprep.subr.mxu0 0.0
        %1115 = vmatpush2.msra.mxu0 0.0
        %1116 = vmatprep.subr.mxu0 0.0
        %1117 = vmatpush2.msra.mxu0 0.0
        %1118 = vmatprep.subr.mxu0 0.0
        %1119 = vmatpush2.msra.mxu0 0.0
        %1120 = vmatprep.subr.mxu0 0.0
        %1121 = vmatpush2.msra.mxu0 0.0
        %1122 = vmatprep.subr.mxu0 0.0
        %1123 = vmatpush2.msra.mxu0 0.0
        %1124 = vmatprep.subr.mxu0 0.0
        %1125 = vmatpush2.msra.mxu0 0.0
        %1126 = vmatprep.subr.mxu0 0.0
        %1127 = vmatpush2.msra.mxu0 0.0
        %1128 = vmatprep.subr.mxu0 0.0
        %1129 = vmatpush2.msra.mxu0 0.0
        %1130 = vmatprep.subr.mxu0 0.0
        %1131 = vmatpush2.msra.mxu0 0.0
        %1132 = vmatprep.subr.mxu0 0.0
        %1133 = vmatpush2.msra.mxu0 0.0
        %1134 = vmatprep.subr.mxu0 0.0
        %1135 = vmatpush2.msra.mxu0 0.0
        %1136 = vmatprep.subr.mxu0 0.0
        %1137 = vmatpush2.msra.mxu0 0.0
        %1138 = vmatprep.subr.mxu0 0.0
        %1139 = vmatpush2.msra.mxu0 0.0
        %1140 = vmatprep.subr.mxu0 0.0
        %1141 = vmatpush2.msra.mxu0 0.0
        %1142 = vmatprep.subr.mxu0 0.0
        %1143 = vmatpush2.msra.mxu0 0.0
        %1144 = vmatprep.mubr.f32.mxu0 0.0
        %1145 = vmatmul.mubr.f32.gmra.mxu0 %v1075
        %v1146 = vpop.f32.mrf.mxu0
        %v1147 = vadd.f32 0.0, %v1146
        %v1148 = vpop.f32.mrf.mxu0
        %v1149 = vadd.f32 0.0, %v1148
        %1150 = vdwg.mxu0
        %1151 = vmatprep.subr.mxu0 %v892
        %1152 = vmatpush1.msra.mxu0 %v891
        %1153 = vmatprep.subr.mxu0 %v888
        %1154 = vmatpush1.msra.mxu0 %v887
        %1155 = vmatprep.subr.mxu0 %v884
        %1156 = vmatpush1.msra.mxu0 %v883
        %1157 = vmatprep.subr.mxu0 %v880
        %1158 = vmatpush1.msra.mxu0 %v879
        %1159 = vmatprep.subr.mxu0 %v876
        %1160 = vmatpush1.msra.mxu0 %v875
        %1161 = vmatprep.subr.mxu0 %v872
        %1162 = vmatpush1.msra.mxu0 %v871
        %1163 = vmatprep.subr.mxu0 %v868
        %1164 = vmatpush1.msra.mxu0 %v867
        %1165 = vmatprep.subr.mxu0 %v864
        %1166 = vmatpush1.msra.mxu0 %v863
        %1167 = vmatprep.subr.mxu0 %v860
        %1168 = vmatpush1.msra.mxu0 %v859
        %1169 = vmatprep.subr.mxu0 %v856
        %1170 = vmatpush1.msra.mxu0 %v855
        %1171 = vmatprep.subr.mxu0 %v852
        %1172 = vmatpush1.msra.mxu0 %v851
        %1173 = vmatprep.subr.mxu0 %v848
        %1174 = vmatpush1.msra.mxu0 %v847
        %1175 = vmatprep.subr.mxu0 %v844
        %1176 = vmatpush1.msra.mxu0 %v843
        %1177 = vmatprep.subr.mxu0 %v840
        %1178 = vmatpush1.msra.mxu0 %v839
        %1179 = vmatprep.subr.mxu0 %v836
        %1180 = vmatpush1.msra.mxu0 %v835
        %1181 = vmatprep.subr.mxu0 %v832
        %1182 = vmatpush1.msra.mxu0 %v831
        %1183 = vmatprep.subr.mxu0 0.0
        %1184 = vmatpush2.msra.mxu0 0.0
        %1185 = vmatprep.subr.mxu0 0.0
        %1186 = vmatpush2.msra.mxu0 0.0
        %1187 = vmatprep.subr.mxu0 0.0
        %1188 = vmatpush2.msra.mxu0 0.0
        %1189 = vmatprep.subr.mxu0 0.0
        %1190 = vmatpush2.msra.mxu0 0.0
        %1191 = vmatprep.subr.mxu0 0.0
        %1192 = vmatpush2.msra.mxu0 0.0
        %1193 = vmatprep.subr.mxu0 0.0
        %1194 = vmatpush2.msra.mxu0 0.0
        %1195 = vmatprep.subr.mxu0 0.0
        %1196 = vmatpush2.msra.mxu0 0.0
        %1197 = vmatprep.subr.mxu0 0.0
        %1198 = vmatpush2.msra.mxu0 0.0
        %1199 = vmatprep.subr.mxu0 0.0
        %1200 = vmatpush2.msra.mxu0 0.0
        %1201 = vmatprep.subr.mxu0 0.0
        %1202 = vmatpush2.msra.mxu0 0.0
        %1203 = vmatprep.subr.mxu0 0.0
        %1204 = vmatpush2.msra.mxu0 0.0
        %1205 = vmatprep.subr.mxu0 0.0
        %1206 = vmatpush2.msra.mxu0 0.0
        %1207 = vmatprep.subr.mxu0 0.0
        %1208 = vmatpush2.msra.mxu0 0.0
        %1209 = vmatprep.subr.mxu0 0.0
        %1210 = vmatpush2.msra.mxu0 0.0
        %1211 = vmatprep.subr.mxu0 0.0
        %1212 = vmatpush2.msra.mxu0 0.0
        %1213 = vmatprep.subr.mxu0 0.0
        %1214 = vmatpush2.msra.mxu0 0.0
        %1215 = vmatprep.mubr.f32.mxu0 0.0
        %1216 = vmatmul.mubr.f32.gmra.mxu0 %v1075
        %v1217 = vpop.f32.mrf.mxu0
        %v1218 = vadd.f32 0.0, %v1217
        %v1219 = vpop.f32.mrf.mxu0
        %v1220 = vadd.f32 0.0, %v1219
        %1221 = vdwg.mxu0
        %v1222 = vadd.f32 %v1076, %v1147
        %v1223 = vadd.f32 %v1077, %v1149
        %v1224 = vadd.f32 %v1078, %v1218
        %v1225 = vadd.f32 %v1079, %v1220
        %v1226 = vmul.f32 %v1222, 0.5
        %v1227 = vmul.f32 %v1223, 0.5
        %v1228 = vmul.f32 %v1224, 0.5
        %v1229 = vtanh.pop %v1226
        %v1230 = vtanh.pop %v1227
        %v1231 = vtanh.pop %v1228
        %v1232 = vadd.f32 %v1229, 1.0
        %v1233 = vadd.f32 %v1230, 1.0
        %v1234 = vadd.f32 %v1231, 1.0
        %v1235 = vmul.f32 %v1232, 0.5
        %v1236 = vmul.f32 %v1233, 0.5
        %v1237 = vmul.f32 %v1234, 0.5
        %v1238 = vtanh.pop %v1225
        %v1239 = vmul.f32 %v1236, %v1073
        %v1240 = vmul.f32 %v1235, %v1238
        %v1241 = vadd.f32 %v1239, %v1240
        %v1242 = vtanh.pop %v1241
        %v1243 = vmul.f32 %v1237, %v1242
        %v1244 = vld [vmem:[#allocation3 + $0x60] sm:$0xff]
        %v1245 = vld [vmem:[#allocation3 + $0x68] sm:$0xff]
        %v1246 = vld [vmem:[#allocation3 + $0x70] sm:$0xff]
        %v1247 = vld [vmem:[#allocation3 + $0x78] sm:$0xff]
        %1248 = vmatprep.subr.mxu0 %v890
        %1249 = vmatpush1.msra.mxu0 %v889
        %1250 = vmatprep.subr.mxu0 %v886
        %1251 = vmatpush1.msra.mxu0 %v885
        %1252 = vmatprep.subr.mxu0 %v882
        %1253 = vmatpush1.msra.mxu0 %v881
        %1254 = vmatprep.subr.mxu0 %v878
        %1255 = vmatpush1.msra.mxu0 %v877
        %1256 = vmatprep.subr.mxu0 %v874
        %1257 = vmatpush1.msra.mxu0 %v873
        %1258 = vmatprep.subr.mxu0 %v870
        %1259 = vmatpush1.msra.mxu0 %v869
        %1260 = vmatprep.subr.mxu0 %v866
        %1261 = vmatpush1.msra.mxu0 %v865
        %1262 = vmatprep.subr.mxu0 %v862
        %1263 = vmatpush1.msra.mxu0 %v861
        %1264 = vmatprep.subr.mxu0 %v858
        %1265 = vmatpush1.msra.mxu0 %v857
        %1266 = vmatprep.subr.mxu0 %v854
        %1267 = vmatpush1.msra.mxu0 %v853
        %1268 = vmatprep.subr.mxu0 %v850
        %1269 = vmatpush1.msra.mxu0 %v849
        %1270 = vmatprep.subr.mxu0 %v846
        %1271 = vmatpush1.msra.mxu0 %v845
        %1272 = vmatprep.subr.mxu0 %v842
        %1273 = vmatpush1.msra.mxu0 %v841
        %1274 = vmatprep.subr.mxu0 %v838
        %1275 = vmatpush1.msra.mxu0 %v837
        %1276 = vmatprep.subr.mxu0 %v834
        %1277 = vmatpush1.msra.mxu0 %v833
        %1278 = vmatprep.subr.mxu0 %v830
        %1279 = vmatpush1.msra.mxu0 %v829
        %1280 = vmatprep.subr.mxu0 0.0
        %1281 = vmatpush2.msra.mxu0 0.0
        %1282 = vmatprep.subr.mxu0 0.0
        %1283 = vmatpush2.msra.mxu0 0.0
        %1284 = vmatprep.subr.mxu0 0.0
        %1285 = vmatpush2.msra.mxu0 0.0
        %1286 = vmatprep.subr.mxu0 0.0
        %1287 = vmatpush2.msra.mxu0 0.0
        %1288 = vmatprep.subr.mxu0 0.0
        %1289 = vmatpush2.msra.mxu0 0.0
        %1290 = vmatprep.subr.mxu0 0.0
        %1291 = vmatpush2.msra.mxu0 0.0
        %1292 = vmatprep.subr.mxu0 0.0
        %1293 = vmatpush2.msra.mxu0 0.0
        %1294 = vmatprep.subr.mxu0 0.0
        %1295 = vmatpush2.msra.mxu0 0.0
        %1296 = vmatprep.subr.mxu0 0.0
        %1297 = vmatpush2.msra.mxu0 0.0
        %1298 = vmatprep.subr.mxu0 0.0
        %1299 = vmatpush2.msra.mxu0 0.0
        %1300 = vmatprep.subr.mxu0 0.0
        %1301 = vmatpush2.msra.mxu0 0.0
        %1302 = vmatprep.subr.mxu0 0.0
        %1303 = vmatpush2.msra.mxu0 0.0
        %1304 = vmatprep.subr.mxu0 0.0
        %1305 = vmatpush2.msra.mxu0 0.0
        %1306 = vmatprep.subr.mxu0 0.0
        %1307 = vmatpush2.msra.mxu0 0.0
        %1308 = vmatprep.subr.mxu0 0.0
        %1309 = vmatpush2.msra.mxu0 0.0
        %1310 = vmatprep.subr.mxu0 0.0
        %1311 = vmatpush2.msra.mxu0 0.0
        %1312 = vmatprep.mubr.f32.mxu0 0.0
        %1313 = vmatmul.mubr.f32.gmra.mxu0 %v1243
        %v1314 = vpop.f32.mrf.mxu0
        %v1315 = vadd.f32 0.0, %v1314
        %v1316 = vpop.f32.mrf.mxu0
        %v1317 = vadd.f32 0.0, %v1316
        %1318 = vdwg.mxu0
        %1319 = vmatprep.subr.mxu0 %v892
        %1320 = vmatpush1.msra.mxu0 %v891
        %1321 = vmatprep.subr.mxu0 %v888
        %1322 = vmatpush1.msra.mxu0 %v887
        %1323 = vmatprep.subr.mxu0 %v884
        %1324 = vmatpush1.msra.mxu0 %v883
        %1325 = vmatprep.subr.mxu0 %v880
        %1326 = vmatpush1.msra.mxu0 %v879
        %1327 = vmatprep.subr.mxu0 %v876
        %1328 = vmatpush1.msra.mxu0 %v875
        %1329 = vmatprep.subr.mxu0 %v872
        %1330 = vmatpush1.msra.mxu0 %v871
        %1331 = vmatprep.subr.mxu0 %v868
        %1332 = vmatpush1.msra.mxu0 %v867
        %1333 = vmatprep.subr.mxu0 %v864
        %1334 = vmatpush1.msra.mxu0 %v863
        %1335 = vmatprep.subr.mxu0 %v860
        %1336 = vmatpush1.msra.mxu0 %v859
        %1337 = vmatprep.subr.mxu0 %v856
        %1338 = vmatpush1.msra.mxu0 %v855
        %1339 = vmatprep.subr.mxu0 %v852
        %1340 = vmatpush1.msra.mxu0 %v851
        %1341 = vmatprep.subr.mxu0 %v848
        %1342 = vmatpush1.msra.mxu0 %v847
        %1343 = vmatprep.subr.mxu0 %v844
        %1344 = vmatpush1.msra.mxu0 %v843
        %1345 = vmatprep.subr.mxu0 %v840
        %1346 = vmatpush1.msra.mxu0 %v839
        %1347 = vmatprep.subr.mxu0 %v836
        %1348 = vmatpush1.msra.mxu0 %v835
        %1349 = vmatprep.subr.mxu0 %v832
        %1350 = vmatpush1.msra.mxu0 %v831
        %1351 = vmatprep.subr.mxu0 0.0
        %1352 = vmatpush2.msra.mxu0 0.0
        %1353 = vmatprep.subr.mxu0 0.0
        %1354 = vmatpush2.msra.mxu0 0.0
        %1355 = vmatprep.subr.mxu0 0.0
        %1356 = vmatpush2.msra.mxu0 0.0
        %1357 = vmatprep.subr.mxu0 0.0
        %1358 = vmatpush2.msra.mxu0 0.0
        %1359 = vmatprep.subr.mxu0 0.0
        %1360 = vmatpush2.msra.mxu0 0.0
        %1361 = vmatprep.subr.mxu0 0.0
        %1362 = vmatpush2.msra.mxu0 0.0
        %1363 = vmatprep.subr.mxu0 0.0
        %1364 = vmatpush2.msra.mxu0 0.0
        %1365 = vmatprep.subr.mxu0 0.0
        %1366 = vmatpush2.msra.mxu0 0.0
        %1367 = vmatprep.subr.mxu0 0.0
        %1368 = vmatpush2.msra.mxu0 0.0
        %1369 = vmatprep.subr.mxu0 0.0
        %1370 = vmatpush2.msra.mxu0 0.0
        %1371 = vmatprep.subr.mxu0 0.0
        %1372 = vmatpush2.msra.mxu0 0.0
        %1373 = vmatprep.subr.mxu0 0.0
        %1374 = vmatpush2.msra.mxu0 0.0
        %1375 = vmatprep.subr.mxu0 0.0
        %1376 = vmatpush2.msra.mxu0 0.0
        %1377 = vmatprep.subr.mxu0 0.0
        %1378 = vmatpush2.msra.mxu0 0.0
        %1379 = vmatprep.subr.mxu0 0.0
        %1380 = vmatpush2.msra.mxu0 0.0
        %1381 = vmatprep.subr.mxu0 0.0
        %1382 = vmatpush2.msra.mxu0 0.0
        %1383 = vmatprep.mubr.f32.mxu0 0.0
        %1384 = vmatmul.mubr.f32.gmra.mxu0 %v1243
        %v1385 = vpop.f32.mrf.mxu0
        %v1386 = vadd.f32 0.0, %v1385
        %v1387 = vpop.f32.mrf.mxu0
        %v1388 = vadd.f32 0.0, %v1387
        %1389 = vdwg.mxu0
        %v1390 = vadd.f32 %v1244, %v1315
        %v1391 = vadd.f32 %v1245, %v1317
        %v1392 = vadd.f32 %v1246, %v1386
        %v1393 = vadd.f32 %v1247, %v1388
        %v1394 = vmul.f32 %v1390, 0.5
        %v1395 = vmul.f32 %v1391, 0.5
        %v1396 = vmul.f32 %v1392, 0.5
        %v1397 = vtanh.pop %v1394
        %v1398 = vtanh.pop %v1395
        %v1399 = vtanh.pop %v1396
        %v1400 = vadd.f32 %v1397, 1.0
        %v1401 = vadd.f32 %v1398, 1.0
        %v1402 = vadd.f32 %v1399, 1.0
        %v1403 = vmul.f32 %v1400, 0.5
        %v1404 = vmul.f32 %v1401, 0.5
        %v1405 = vmul.f32 %v1402, 0.5
        %v1406 = vtanh.pop %v1393
        %v1407 = vmul.f32 %v1404, %v1241
        %v1408 = vmul.f32 %v1403, %v1406
        %v1409 = vadd.f32 %v1407, %v1408
        %v1410 = vtanh.pop %v1409
        %v1411 = vmul.f32 %v1405, %v1410
        %v1412 = vld [vmem:[#allocation3 + $0x80] sm:$0xff]
        %v1413 = vld [vmem:[#allocation3 + $0x88] sm:$0xff]
        %v1414 = vld [vmem:[#allocation3 + $0x90] sm:$0xff]
        %v1415 = vld [vmem:[#allocation3 + $0x98] sm:$0xff]
        %1416 = vmatprep.subr.mxu0 %v890
        %1417 = vmatpush1.msra.mxu0 %v889
        %1418 = vmatprep.subr.mxu0 %v886
        %1419 = vmatpush1.msra.mxu0 %v885
        %1420 = vmatprep.subr.mxu0 %v882
        %1421 = vmatpush1.msra.mxu0 %v881
        %1422 = vmatprep.subr.mxu0 %v878
        %1423 = vmatpush1.msra.mxu0 %v877
        %1424 = vmatprep.subr.mxu0 %v874
        %1425 = vmatpush1.msra.mxu0 %v873
        %1426 = vmatprep.subr.mxu0 %v870
        %1427 = vmatpush1.msra.mxu0 %v869
        %1428 = vmatprep.subr.mxu0 %v866
        %1429 = vmatpush1.msra.mxu0 %v865
        %1430 = vmatprep.subr.mxu0 %v862
        %1431 = vmatpush1.msra.mxu0 %v861
        %1432 = vmatprep.subr.mxu0 %v858
        %1433 = vmatpush1.msra.mxu0 %v857
        %1434 = vmatprep.subr.mxu0 %v854
        %1435 = vmatpush1.msra.mxu0 %v853
        %1436 = vmatprep.subr.mxu0 %v850
        %1437 = vmatpush1.msra.mxu0 %v849
        %1438 = vmatprep.subr.mxu0 %v846
        %1439 = vmatpush1.msra.mxu0 %v845
        %1440 = vmatprep.subr.mxu0 %v842
        %1441 = vmatpush1.msra.mxu0 %v841
        %1442 = vmatprep.subr.mxu0 %v838
        %1443 = vmatpush1.msra.mxu0 %v837
        %1444 = vmatprep.subr.mxu0 %v834
        %1445 = vmatpush1.msra.mxu0 %v833
        %1446 = vmatprep.subr.mxu0 %v830
        %1447 = vmatpush1.msra.mxu0 %v829
        %1448 = vmatprep.subr.mxu0 0.0
        %1449 = vmatpush2.msra.mxu0 0.0
        %1450 = vmatprep.subr.mxu0 0.0
        %1451 = vmatpush2.msra.mxu0 0.0
        %1452 = vmatprep.subr.mxu0 0.0
        %1453 = vmatpush2.msra.mxu0 0.0
        %1454 = vmatprep.subr.mxu0 0.0
        %1455 = vmatpush2.msra.mxu0 0.0
        %1456 = vmatprep.subr.mxu0 0.0
        %1457 = vmatpush2.msra.mxu0 0.0
        %1458 = vmatprep.subr.mxu0 0.0
        %1459 = vmatpush2.msra.mxu0 0.0
        %1460 = vmatprep.subr.mxu0 0.0
        %1461 = vmatpush2.msra.mxu0 0.0
        %1462 = vmatprep.subr.mxu0 0.0
        %1463 = vmatpush2.msra.mxu0 0.0
        %1464 = vmatprep.subr.mxu0 0.0
        %1465 = vmatpush2.msra.mxu0 0.0
        %1466 = vmatprep.subr.mxu0 0.0
        %1467 = vmatpush2.msra.mxu0 0.0
        %1468 = vmatprep.subr.mxu0 0.0
        %1469 = vmatpush2.msra.mxu0 0.0
        %1470 = vmatprep.subr.mxu0 0.0
        %1471 = vmatpush2.msra.mxu0 0.0
        %1472 = vmatprep.subr.mxu0 0.0
        %1473 = vmatpush2.msra.mxu0 0.0
        %1474 = vmatprep.subr.mxu0 0.0
        %1475 = vmatpush2.msra.mxu0 0.0
        %1476 = vmatprep.subr.mxu0 0.0
        %1477 = vmatpush2.msra.mxu0 0.0
        %1478 = vmatprep.subr.mxu0 0.0
        %1479 = vmatpush2.msra.mxu0 0.0
        %1480 = vmatprep.mubr.f32.mxu0 0.0
        %1481 = vmatmul.mubr.f32.gmra.mxu0 %v1411
        %v1482 = vpop.f32.mrf.mxu0
        %v1483 = vadd.f32 0.0, %v1482
        %v1484 = vpop.f32.mrf.mxu0
        %v1485 = vadd.f32 0.0, %v1484
        %1486 = vdwg.mxu0
        %1487 = vmatprep.subr.mxu0 %v892
        %1488 = vmatpush1.msra.mxu0 %v891
        %1489 = vmatprep.subr.mxu0 %v888
        %1490 = vmatpush1.msra.mxu0 %v887
        %1491 = vmatprep.subr.mxu0 %v884
        %1492 = vmatpush1.msra.mxu0 %v883
        %1493 = vmatprep.subr.mxu0 %v880
        %1494 = vmatpush1.msra.mxu0 %v879
        %1495 = vmatprep.subr.mxu0 %v876
        %1496 = vmatpush1.msra.mxu0 %v875
        %1497 = vmatprep.subr.mxu0 %v872
        %1498 = vmatpush1.msra.mxu0 %v871
        %1499 = vmatprep.subr.mxu0 %v868
        %1500 = vmatpush1.msra.mxu0 %v867
        %1501 = vmatprep.subr.mxu0 %v864
        %1502 = vmatpush1.msra.mxu0 %v863
        %1503 = vmatprep.subr.mxu0 %v860
        %1504 = vmatpush1.msra.mxu0 %v859
        %1505 = vmatprep.subr.mxu0 %v856
        %1506 = vmatpush1.msra.mxu0 %v855
        %1507 = vmatprep.subr.mxu0 %v852
        %1508 = vmatpush1.msra.mxu0 %v851
        %1509 = vmatprep.subr.mxu0 %v848
        %1510 = vmatpush1.msra.mxu0 %v847
        %1511 = vmatprep.subr.mxu0 %v844
        %1512 = vmatpush1.msra.mxu0 %v843
        %1513 = vmatprep.subr.mxu0 %v840
        %1514 = vmatpush1.msra.mxu0 %v839
        %1515 = vmatprep.subr.mxu0 %v836
        %1516 = vmatpush1.msra.mxu0 %v835
        %1517 = vmatprep.subr.mxu0 %v832
        %1518 = vmatpush1.msra.mxu0 %v831
        %1519 = vmatprep.subr.mxu0 0.0
        %1520 = vmatpush2.msra.mxu0 0.0
        %1521 = vmatprep.subr.mxu0 0.0
        %1522 = vmatpush2.msra.mxu0 0.0
        %1523 = vmatprep.subr.mxu0 0.0
        %1524 = vmatpush2.msra.mxu0 0.0
        %1525 = vmatprep.subr.mxu0 0.0
        %1526 = vmatpush2.msra.mxu0 0.0
        %1527 = vmatprep.subr.mxu0 0.0
        %1528 = vmatpush2.msra.mxu0 0.0
        %1529 = vmatprep.subr.mxu0 0.0
        %1530 = vmatpush2.msra.mxu0 0.0
        %1531 = vmatprep.subr.mxu0 0.0
        %1532 = vmatpush2.msra.mxu0 0.0
        %1533 = vmatprep.subr.mxu0 0.0
        %1534 = vmatpush2.msra.mxu0 0.0
        %1535 = vmatprep.subr.mxu0 0.0
        %1536 = vmatpush2.msra.mxu0 0.0
        %1537 = vmatprep.subr.mxu0 0.0
        %1538 = vmatpush2.msra.mxu0 0.0
        %1539 = vmatprep.subr.mxu0 0.0
        %1540 = vmatpush2.msra.mxu0 0.0
        %1541 = vmatprep.subr.mxu0 0.0
        %1542 = vmatpush2.msra.mxu0 0.0
        %1543 = vmatprep.subr.mxu0 0.0
        %1544 = vmatpush2.msra.mxu0 0.0
        %1545 = vmatprep.subr.mxu0 0.0
        %1546 = vmatpush2.msra.mxu0 0.0
        %1547 = vmatprep.subr.mxu0 0.0
        %1548 = vmatpush2.msra.mxu0 0.0
        %1549 = vmatprep.subr.mxu0 0.0
        %1550 = vmatpush2.msra.mxu0 0.0
        %1551 = vmatprep.mubr.f32.mxu0 0.0
        %1552 = vmatmul.mubr.f32.gmra.mxu0 %v1411
        %v1553 = vpop.f32.mrf.mxu0
        %v1554 = vadd.f32 0.0, %v1553
        %v1555 = vpop.f32.mrf.mxu0
        %v1556 = vadd.f32 0.0, %v1555
        %1557 = vdwg.mxu0
        %v1558 = vadd.f32 %v1412, %v1483
        %v1559 = vadd.f32 %v1413, %v1485
        %v1560 = vadd.f32 %v1414, %v1554
        %v1561 = vadd.f32 %v1415, %v1556
        %v1562 = vmul.f32 %v1558, 0.5
        %v1563 = vmul.f32 %v1559, 0.5
        %v1564 = vmul.f32 %v1560, 0.5
        %v1565 = vtanh.pop %v1562
        %v1566 = vtanh.pop %v1563
        %v1567 = vtanh.pop %v1564
        %v1568 = vadd.f32 %v1565, 1.0
        %v1569 = vadd.f32 %v1566, 1.0
        %v1570 = vadd.f32 %v1567, 1.0
        %v1571 = vmul.f32 %v1568, 0.5
        %v1572 = vmul.f32 %v1569, 0.5
        %v1573 = vmul.f32 %v1570, 0.5
        %v1574 = vtanh.pop %v1561
        %v1575 = vmul.f32 %v1572, %v1409
        %v1576 = vmul.f32 %v1571, %v1574
        %v1577 = vadd.f32 %v1575, %v1576
        %v1578 = vtanh.pop %v1577
        %v1579 = vmul.f32 %v1573, %v1578
        %v1580 = vld [vmem:[#allocation3 + $0xa0] sm:$0xff]
        %v1581 = vld [vmem:[#allocation3 + $0xa8] sm:$0xff]
        %v1582 = vld [vmem:[#allocation3 + $0xb0] sm:$0xff]
        %v1583 = vld [vmem:[#allocation3 + $0xb8] sm:$0xff]
        %1584 = vmatprep.subr.mxu0 %v890
        %1585 = vmatpush1.msra.mxu0 %v889
        %1586 = vmatprep.subr.mxu0 %v886
        %1587 = vmatpush1.msra.mxu0 %v885
        %1588 = vmatprep.subr.mxu0 %v882
        %1589 = vmatpush1.msra.mxu0 %v881
        %1590 = vmatprep.subr.mxu0 %v878
        %1591 = vmatpush1.msra.mxu0 %v877
        %1592 = vmatprep.subr.mxu0 %v874
        %1593 = vmatpush1.msra.mxu0 %v873
        %1594 = vmatprep.subr.mxu0 %v870
        %1595 = vmatpush1.msra.mxu0 %v869
        %1596 = vmatprep.subr.mxu0 %v866
        %1597 = vmatpush1.msra.mxu0 %v865
        %1598 = vmatprep.subr.mxu0 %v862
        %1599 = vmatpush1.msra.mxu0 %v861
        %1600 = vmatprep.subr.mxu0 %v858
        %1601 = vmatpush1.msra.mxu0 %v857
        %1602 = vmatprep.subr.mxu0 %v854
        %1603 = vmatpush1.msra.mxu0 %v853
        %1604 = vmatprep.subr.mxu0 %v850
        %1605 = vmatpush1.msra.mxu0 %v849
        %1606 = vmatprep.subr.mxu0 %v846
        %1607 = vmatpush1.msra.mxu0 %v845
        %1608 = vmatprep.subr.mxu0 %v842
        %1609 = vmatpush1.msra.mxu0 %v841
        %1610 = vmatprep.subr.mxu0 %v838
        %1611 = vmatpush1.msra.mxu0 %v837
        %1612 = vmatprep.subr.mxu0 %v834
        %1613 = vmatpush1.msra.mxu0 %v833
        %1614 = vmatprep.subr.mxu0 %v830
        %1615 = vmatpush1.msra.mxu0 %v829
        %1616 = vmatprep.subr.mxu0 0.0
        %1617 = vmatpush2.msra.mxu0 0.0
        %1618 = vmatprep.subr.mxu0 0.0
        %1619 = vmatpush2.msra.mxu0 0.0
        %1620 = vmatprep.subr.mxu0 0.0
        %1621 = vmatpush2.msra.mxu0 0.0
        %1622 = vmatprep.subr.mxu0 0.0
        %1623 = vmatpush2.msra.mxu0 0.0
        %1624 = vmatprep.subr.mxu0 0.0
        %1625 = vmatpush2.msra.mxu0 0.0
        %1626 = vmatprep.subr.mxu0 0.0
        %1627 = vmatpush2.msra.mxu0 0.0
        %1628 = vmatprep.subr.mxu0 0.0
        %1629 = vmatpush2.msra.mxu0 0.0
        %1630 = vmatprep.subr.mxu0 0.0
        %1631 = vmatpush2.msra.mxu0 0.0
        %1632 = vmatprep.subr.mxu0 0.0
        %1633 = vmatpush2.msra.mxu0 0.0
        %1634 = vmatprep.subr.mxu0 0.0
        %1635 = vmatpush2.msra.mxu0 0.0
        %1636 = vmatprep.subr.mxu0 0.0
        %1637 = vmatpush2.msra.mxu0 0.0
        %1638 = vmatprep.subr.mxu0 0.0
        %1639 = vmatpush2.msra.mxu0 0.0
        %1640 = vmatprep.subr.mxu0 0.0
        %1641 = vmatpush2.msra.mxu0 0.0
        %1642 = vmatprep.subr.mxu0 0.0
        %1643 = vmatpush2.msra.mxu0 0.0
        %1644 = vmatprep.subr.mxu0 0.0
        %1645 = vmatpush2.msra.mxu0 0.0
        %1646 = vmatprep.subr.mxu0 0.0
        %1647 = vmatpush2.msra.mxu0 0.0
        %1648 = vmatprep.mubr.f32.mxu0 0.0
        %1649 = vmatmul.mubr.f32.gmra.mxu0 %v1579
        %v1650 = vpop.f32.mrf.mxu0
        %v1651 = vadd.f32 0.0, %v1650
        %v1652 = vpop.f32.mrf.mxu0
        %v1653 = vadd.f32 0.0, %v1652
        %1654 = vdwg.mxu0
        %1655 = vmatprep.subr.mxu0 %v892
        %1656 = vmatpush1.msra.mxu0 %v891
        %1657 = vmatprep.subr.mxu0 %v888
        %1658 = vmatpush1.msra.mxu0 %v887
        %1659 = vmatprep.subr.mxu0 %v884
        %1660 = vmatpush1.msra.mxu0 %v883
        %1661 = vmatprep.subr.mxu0 %v880
        %1662 = vmatpush1.msra.mxu0 %v879
        %1663 = vmatprep.subr.mxu0 %v876
        %1664 = vmatpush1.msra.mxu0 %v875
        %1665 = vmatprep.subr.mxu0 %v872
        %1666 = vmatpush1.msra.mxu0 %v871
        %1667 = vmatprep.subr.mxu0 %v868
        %1668 = vmatpush1.msra.mxu0 %v867
        %1669 = vmatprep.subr.mxu0 %v864
        %1670 = vmatpush1.msra.mxu0 %v863
        %1671 = vmatprep.subr.mxu0 %v860
        %1672 = vmatpush1.msra.mxu0 %v859
        %1673 = vmatprep.subr.mxu0 %v856
        %1674 = vmatpush1.msra.mxu0 %v855
        %1675 = vmatprep.subr.mxu0 %v852
        %1676 = vmatpush1.msra.mxu0 %v851
        %1677 = vmatprep.subr.mxu0 %v848
        %1678 = vmatpush1.msra.mxu0 %v847
        %1679 = vmatprep.subr.mxu0 %v844
        %1680 = vmatpush1.msra.mxu0 %v843
        %1681 = vmatprep.subr.mxu0 %v840
        %1682 = vmatpush1.msra.mxu0 %v839
        %1683 = vmatprep.subr.mxu0 %v836
        %1684 = vmatpush1.msra.mxu0 %v835
        %1685 = vmatprep.subr.mxu0 %v832
        %1686 = vmatpush1.msra.mxu0 %v831
        %1687 = vmatprep.subr.mxu0 0.0
        %1688 = vmatpush2.msra.mxu0 0.0
        %1689 = vmatprep.subr.mxu0 0.0
        %1690 = vmatpush2.msra.mxu0 0.0
        %1691 = vmatprep.subr.mxu0 0.0
        %1692 = vmatpush2.msra.mxu0 0.0
        %1693 = vmatprep.subr.mxu0 0.0
        %1694 = vmatpush2.msra.mxu0 0.0
        %1695 = vmatprep.subr.mxu0 0.0
        %1696 = vmatpush2.msra.mxu0 0.0
        %1697 = vmatprep.subr.mxu0 0.0
        %1698 = vmatpush2.msra.mxu0 0.0
        %1699 = vmatprep.subr.mxu0 0.0
        %1700 = vmatpush2.msra.mxu0 0.0
        %1701 = vmatprep.subr.mxu0 0.0
        %1702 = vmatpush2.msra.mxu0 0.0
        %1703 = vmatprep.subr.mxu0 0.0
        %1704 = vmatpush2.msra.mxu0 0.0
        %1705 = vmatprep.subr.mxu0 0.0
        %1706 = vmatpush2.msra.mxu0 0.0
        %1707 = vmatprep.subr.mxu0 0.0
        %1708 = vmatpush2.msra.mxu0 0.0
        %1709 = vmatprep.subr.mxu0 0.0
        %1710 = vmatpush2.msra.mxu0 0.0
        %1711 = vmatprep.subr.mxu0 0.0
        %1712 = vmatpush2.msra.mxu0 0.0
        %1713 = vmatprep.subr.mxu0 0.0
        %1714 = vmatpush2.msra.mxu0 0.0
        %1715 = vmatprep.subr.mxu0 0.0
        %1716 = vmatpush2.msra.mxu0 0.0
        %1717 = vmatprep.subr.mxu0 0.0
        %1718 = vmatpush2.msra.mxu0 0.0
        %1719 = vmatprep.mubr.f32.mxu0 0.0
        %1720 = vmatmul.mubr.f32.gmra.mxu0 %v1579
        %v1721 = vpop.f32.mrf.mxu0
        %v1722 = vadd.f32 0.0, %v1721
        %v1723 = vpop.f32.mrf.mxu0
        %v1724 = vadd.f32 0.0, %v1723
        %1725 = vdwg.mxu0
        %v1726 = vadd.f32 %v1580, %v1651
        %v1727 = vadd.f32 %v1581, %v1653
        %v1728 = vadd.f32 %v1582, %v1722
        %v1729 = vadd.f32 %v1583, %v1724
        %v1730 = vmul.f32 %v1726, 0.5
        %v1731 = vmul.f32 %v1727, 0.5
        %v1732 = vmul.f32 %v1728, 0.5
        %v1733 = vtanh.pop %v1730
        %v1734 = vtanh.pop %v1731
        %v1735 = vtanh.pop %v1732
        %v1736 = vadd.f32 %v1733, 1.0
        %v1737 = vadd.f32 %v1734, 1.0
        %v1738 = vadd.f32 %v1735, 1.0
        %v1739 = vmul.f32 %v1736, 0.5
        %v1740 = vmul.f32 %v1737, 0.5
        %v1741 = vmul.f32 %v1738, 0.5
        %v1742 = vtanh.pop %v1729
        %v1743 = vmul.f32 %v1740, %v1577
        %v1744 = vmul.f32 %v1739, %v1742
        %v1745 = vadd.f32 %v1743, %v1744
        %v1746 = vtanh.pop %v1745
        %v1747 = vmul.f32 %v1741, %v1746
        %v1748 = vld [vmem:[#allocation3 + $0xc0] sm:$0xff]
        %v1749 = vld [vmem:[#allocation3 + $0xc8] sm:$0xff]
        %v1750 = vld [vmem:[#allocation3 + $0xd0] sm:$0xff]
        %v1751 = vld [vmem:[#allocation3 + $0xd8] sm:$0xff]
        %1752 = vmatprep.subr.mxu0 %v890
        %1753 = vmatpush1.msra.mxu0 %v889
        %1754 = vmatprep.subr.mxu0 %v886
        %1755 = vmatpush1.msra.mxu0 %v885
        %1756 = vmatprep.subr.mxu0 %v882
        %1757 = vmatpush1.msra.mxu0 %v881
        %1758 = vmatprep.subr.mxu0 %v878
        %1759 = vmatpush1.msra.mxu0 %v877
        %1760 = vmatprep.subr.mxu0 %v874
        %1761 = vmatpush1.msra.mxu0 %v873
        %1762 = vmatprep.subr.mxu0 %v870
        %1763 = vmatpush1.msra.mxu0 %v869
        %1764 = vmatprep.subr.mxu0 %v866
        %1765 = vmatpush1.msra.mxu0 %v865
        %1766 = vmatprep.subr.mxu0 %v862
        %1767 = vmatpush1.msra.mxu0 %v861
        %1768 = vmatprep.subr.mxu0 %v858
        %1769 = vmatpush1.msra.mxu0 %v857
        %1770 = vmatprep.subr.mxu0 %v854
        %1771 = vmatpush1.msra.mxu0 %v853
        %1772 = vmatprep.subr.mxu0 %v850
        %1773 = vmatpush1.msra.mxu0 %v849
        %1774 = vmatprep.subr.mxu0 %v846
        %1775 = vmatpush1.msra.mxu0 %v845
        %1776 = vmatprep.subr.mxu0 %v842
        %1777 = vmatpush1.msra.mxu0 %v841
        %1778 = vmatprep.subr.mxu0 %v838
        %1779 = vmatpush1.msra.mxu0 %v837
        %1780 = vmatprep.subr.mxu0 %v834
        %1781 = vmatpush1.msra.mxu0 %v833
        %1782 = vmatprep.subr.mxu0 %v830
        %1783 = vmatpush1.msra.mxu0 %v829
        %1784 = vmatprep.subr.mxu0 0.0
        %1785 = vmatpush2.msra.mxu0 0.0
        %1786 = vmatprep.subr.mxu0 0.0
        %1787 = vmatpush2.msra.mxu0 0.0
        %1788 = vmatprep.subr.mxu0 0.0
        %1789 = vmatpush2.msra.mxu0 0.0
        %1790 = vmatprep.subr.mxu0 0.0
        %1791 = vmatpush2.msra.mxu0 0.0
        %1792 = vmatprep.subr.mxu0 0.0
        %1793 = vmatpush2.msra.mxu0 0.0
        %1794 = vmatprep.subr.mxu0 0.0
        %1795 = vmatpush2.msra.mxu0 0.0
        %1796 = vmatprep.subr.mxu0 0.0
        %1797 = vmatpush2.msra.mxu0 0.0
        %1798 = vmatprep.subr.mxu0 0.0
        %1799 = vmatpush2.msra.mxu0 0.0
        %1800 = vmatprep.subr.mxu0 0.0
        %1801 = vmatpush2.msra.mxu0 0.0
        %1802 = vmatprep.subr.mxu0 0.0
        %1803 = vmatpush2.msra.mxu0 0.0
        %1804 = vmatprep.subr.mxu0 0.0
        %1805 = vmatpush2.msra.mxu0 0.0
        %1806 = vmatprep.subr.mxu0 0.0
        %1807 = vmatpush2.msra.mxu0 0.0
        %1808 = vmatprep.subr.mxu0 0.0
        %1809 = vmatpush2.msra.mxu0 0.0
        %1810 = vmatprep.subr.mxu0 0.0
        %1811 = vmatpush2.msra.mxu0 0.0
        %1812 = vmatprep.subr.mxu0 0.0
        %1813 = vmatpush2.msra.mxu0 0.0
        %1814 = vmatprep.subr.mxu0 0.0
        %1815 = vmatpush2.msra.mxu0 0.0
        %1816 = vmatprep.mubr.f32.mxu0 0.0
        %1817 = vmatmul.mubr.f32.gmra.mxu0 %v1747
        %v1818 = vpop.f32.mrf.mxu0
        %v1819 = vadd.f32 0.0, %v1818
        %v1820 = vpop.f32.mrf.mxu0
        %v1821 = vadd.f32 0.0, %v1820
        %1822 = vdwg.mxu0
        %1823 = vmatprep.subr.mxu0 %v892
        %1824 = vmatpush1.msra.mxu0 %v891
        %1825 = vmatprep.subr.mxu0 %v888
        %1826 = vmatpush1.msra.mxu0 %v887
        %1827 = vmatprep.subr.mxu0 %v884
        %1828 = vmatpush1.msra.mxu0 %v883
        %1829 = vmatprep.subr.mxu0 %v880
        %1830 = vmatpush1.msra.mxu0 %v879
        %1831 = vmatprep.subr.mxu0 %v876
        %1832 = vmatpush1.msra.mxu0 %v875
        %1833 = vmatprep.subr.mxu0 %v872
        %1834 = vmatpush1.msra.mxu0 %v871
        %1835 = vmatprep.subr.mxu0 %v868
        %1836 = vmatpush1.msra.mxu0 %v867
        %1837 = vmatprep.subr.mxu0 %v864
        %1838 = vmatpush1.msra.mxu0 %v863
        %1839 = vmatprep.subr.mxu0 %v860
        %1840 = vmatpush1.msra.mxu0 %v859
        %1841 = vmatprep.subr.mxu0 %v856
        %1842 = vmatpush1.msra.mxu0 %v855
        %1843 = vmatprep.subr.mxu0 %v852
        %1844 = vmatpush1.msra.mxu0 %v851
        %1845 = vmatprep.subr.mxu0 %v848
        %1846 = vmatpush1.msra.mxu0 %v847
        %1847 = vmatprep.subr.mxu0 %v844
        %1848 = vmatpush1.msra.mxu0 %v843
        %1849 = vmatprep.subr.mxu0 %v840
        %1850 = vmatpush1.msra.mxu0 %v839
        %1851 = vmatprep.subr.mxu0 %v836
        %1852 = vmatpush1.msra.mxu0 %v835
        %1853 = vmatprep.subr.mxu0 %v832
        %1854 = vmatpush1.msra.mxu0 %v831
        %1855 = vmatprep.subr.mxu0 0.0
        %1856 = vmatpush2.msra.mxu0 0.0
        %1857 = vmatprep.subr.mxu0 0.0
        %1858 = vmatpush2.msra.mxu0 0.0
        %1859 = vmatprep.subr.mxu0 0.0
        %1860 = vmatpush2.msra.mxu0 0.0
        %1861 = vmatprep.subr.mxu0 0.0
        %1862 = vmatpush2.msra.mxu0 0.0
        %1863 = vmatprep.subr.mxu0 0.0
        %1864 = vmatpush2.msra.mxu0 0.0
        %1865 = vmatprep.subr.mxu0 0.0
        %1866 = vmatpush2.msra.mxu0 0.0
        %1867 = vmatprep.subr.mxu0 0.0
        %1868 = vmatpush2.msra.mxu0 0.0
        %1869 = vmatprep.subr.mxu0 0.0
        %1870 = vmatpush2.msra.mxu0 0.0
        %1871 = vmatprep.subr.mxu0 0.0
        %1872 = vmatpush2.msra.mxu0 0.0
        %1873 = vmatprep.subr.mxu0 0.0
        %1874 = vmatpush2.msra.mxu0 0.0
        %1875 = vmatprep.subr.mxu0 0.0
        %1876 = vmatpush2.msra.mxu0 0.0
        %1877 = vmatprep.subr.mxu0 0.0
        %1878 = vmatpush2.msra.mxu0 0.0
        %1879 = vmatprep.subr.mxu0 0.0
        %1880 = vmatpush2.msra.mxu0 0.0
        %1881 = vmatprep.subr.mxu0 0.0
        %1882 = vmatpush2.msra.mxu0 0.0
        %1883 = vmatprep.subr.mxu0 0.0
        %1884 = vmatpush2.msra.mxu0 0.0
        %1885 = vmatprep.subr.mxu0 0.0
        %1886 = vmatpush2.msra.mxu0 0.0
        %1887 = vmatprep.mubr.f32.mxu0 0.0
        %1888 = vmatmul.mubr.f32.gmra.mxu0 %v1747
        %v1889 = vpop.f32.mrf.mxu0
        %v1890 = vadd.f32 0.0, %v1889
        %v1891 = vpop.f32.mrf.mxu0
        %v1892 = vadd.f32 0.0, %v1891
        %1893 = vdwg.mxu0
        %v1894 = vadd.f32 %v1748, %v1819
        %v1895 = vadd.f32 %v1749, %v1821
        %v1896 = vadd.f32 %v1750, %v1890
        %v1897 = vadd.f32 %v1751, %v1892
        %v1898 = vmul.f32 %v1894, 0.5
        %v1899 = vmul.f32 %v1895, 0.5
        %v1900 = vmul.f32 %v1896, 0.5
        %v1901 = vtanh.pop %v1898
        %v1902 = vtanh.pop %v1899
        %v1903 = vtanh.pop %v1900
        %v1904 = vadd.f32 %v1901, 1.0
        %v1905 = vadd.f32 %v1902, 1.0
        %v1906 = vadd.f32 %v1903, 1.0
        %v1907 = vmul.f32 %v1904, 0.5
        %v1908 = vmul.f32 %v1905, 0.5
        %v1909 = vmul.f32 %v1906, 0.5
        %v1910 = vtanh.pop %v1897
        %v1911 = vmul.f32 %v1908, %v1745
        %v1912 = vmul.f32 %v1907, %v1910
        %v1913 = vadd.f32 %v1911, %v1912
        %v1914 = vtanh.pop %v1913
        %v1915 = vmul.f32 %v1909, %v1914
        %v1916 = vld [vmem:[#allocation3 + $0xe0] sm:$0xff]
        %v1917 = vld [vmem:[#allocation3 + $0xe8] sm:$0xff]
        %v1918 = vld [vmem:[#allocation3 + $0xf0] sm:$0xff]
        %v1919 = vld [vmem:[#allocation3 + $0xf8] sm:$0xff]
        %1920 = vmatprep.subr.mxu0 %v890
        %1921 = vmatpush1.msra.mxu0 %v889
        %1922 = vmatprep.subr.mxu0 %v886
        %1923 = vmatpush1.msra.mxu0 %v885
        %1924 = vmatprep.subr.mxu0 %v882
        %1925 = vmatpush1.msra.mxu0 %v881
        %1926 = vmatprep.subr.mxu0 %v878
        %1927 = vmatpush1.msra.mxu0 %v877
        %1928 = vmatprep.subr.mxu0 %v874
        %1929 = vmatpush1.msra.mxu0 %v873
        %1930 = vmatprep.subr.mxu0 %v870
        %1931 = vmatpush1.msra.mxu0 %v869
        %1932 = vmatprep.subr.mxu0 %v866
        %1933 = vmatpush1.msra.mxu0 %v865
        %1934 = vmatprep.subr.mxu0 %v862
        %1935 = vmatpush1.msra.mxu0 %v861
        %1936 = vmatprep.subr.mxu0 %v858
        %1937 = vmatpush1.msra.mxu0 %v857
        %1938 = vmatprep.subr.mxu0 %v854
        %1939 = vmatpush1.msra.mxu0 %v853
        %1940 = vmatprep.subr.mxu0 %v850
        %1941 = vmatpush1.msra.mxu0 %v849
        %1942 = vmatprep.subr.mxu0 %v846
        %1943 = vmatpush1.msra.mxu0 %v845
        %1944 = vmatprep.subr.mxu0 %v842
        %1945 = vmatpush1.msra.mxu0 %v841
        %1946 = vmatprep.subr.mxu0 %v838
        %1947 = vmatpush1.msra.mxu0 %v837
        %1948 = vmatprep.subr.mxu0 %v834
        %1949 = vmatpush1.msra.mxu0 %v833
        %1950 = vmatprep.subr.mxu0 %v830
        %1951 = vmatpush1.msra.mxu0 %v829
        %1952 = vmatprep.subr.mxu0 0.0
        %1953 = vmatpush2.msra.mxu0 0.0
        %1954 = vmatprep.subr.mxu0 0.0
        %1955 = vmatpush2.msra.mxu0 0.0
        %1956 = vmatprep.subr.mxu0 0.0
        %1957 = vmatpush2.msra.mxu0 0.0
        %1958 = vmatprep.subr.mxu0 0.0
        %1959 = vmatpush2.msra.mxu0 0.0
        %1960 = vmatprep.subr.mxu0 0.0
        %1961 = vmatpush2.msra.mxu0 0.0
        %1962 = vmatprep.subr.mxu0 0.0
        %1963 = vmatpush2.msra.mxu0 0.0
        %1964 = vmatprep.subr.mxu0 0.0
        %1965 = vmatpush2.msra.mxu0 0.0
        %1966 = vmatprep.subr.mxu0 0.0
        %1967 = vmatpush2.msra.mxu0 0.0
        %1968 = vmatprep.subr.mxu0 0.0
        %1969 = vmatpush2.msra.mxu0 0.0
        %1970 = vmatprep.subr.mxu0 0.0
        %1971 = vmatpush2.msra.mxu0 0.0
        %1972 = vmatprep.subr.mxu0 0.0
        %1973 = vmatpush2.msra.mxu0 0.0
        %1974 = vmatprep.subr.mxu0 0.0
        %1975 = vmatpush2.msra.mxu0 0.0
        %1976 = vmatprep.subr.mxu0 0.0
        %1977 = vmatpush2.msra.mxu0 0.0
        %1978 = vmatprep.subr.mxu0 0.0
        %1979 = vmatpush2.msra.mxu0 0.0
        %1980 = vmatprep.subr.mxu0 0.0
        %1981 = vmatpush2.msra.mxu0 0.0
        %1982 = vmatprep.subr.mxu0 0.0
        %1983 = vmatpush2.msra.mxu0 0.0
        %1984 = vmatprep.mubr.f32.mxu0 0.0
        %1985 = vmatmul.mubr.f32.gmra.mxu0 %v1915
        %v1986 = vpop.f32.mrf.mxu0
        %v1987 = vadd.f32 0.0, %v1986
        %v1988 = vpop.f32.mrf.mxu0
        %v1989 = vadd.f32 0.0, %v1988
        %1990 = vdwg.mxu0
        %1991 = vmatprep.subr.mxu0 %v892
        %1992 = vmatpush1.msra.mxu0 %v891
        %1993 = vmatprep.subr.mxu0 %v888
        %1994 = vmatpush1.msra.mxu0 %v887
        %1995 = vmatprep.subr.mxu0 %v884
        %1996 = vmatpush1.msra.mxu0 %v883
        %1997 = vmatprep.subr.mxu0 %v880
        %1998 = vmatpush1.msra.mxu0 %v879
        %1999 = vmatprep.subr.mxu0 %v876
        %2000 = vmatpush1.msra.mxu0 %v875
        %2001 = vmatprep.subr.mxu0 %v872
        %2002 = vmatpush1.msra.mxu0 %v871
        %2003 = vmatprep.subr.mxu0 %v868
        %2004 = vmatpush1.msra.mxu0 %v867
        %2005 = vmatprep.subr.mxu0 %v864
        %2006 = vmatpush1.msra.mxu0 %v863
        %2007 = vmatprep.subr.mxu0 %v860
        %2008 = vmatpush1.msra.mxu0 %v859
        %2009 = vmatprep.subr.mxu0 %v856
        %2010 = vmatpush1.msra.mxu0 %v855
        %2011 = vmatprep.subr.mxu0 %v852
        %2012 = vmatpush1.msra.mxu0 %v851
        %2013 = vmatprep.subr.mxu0 %v848
        %2014 = vmatpush1.msra.mxu0 %v847
        %2015 = vmatprep.subr.mxu0 %v844
        %2016 = vmatpush1.msra.mxu0 %v843
        %2017 = vmatprep.subr.mxu0 %v840
        %2018 = vmatpush1.msra.mxu0 %v839
        %2019 = vmatprep.subr.mxu0 %v836
        %2020 = vmatpush1.msra.mxu0 %v835
        %2021 = vmatprep.subr.mxu0 %v832
        %2022 = vmatpush1.msra.mxu0 %v831
        %2023 = vmatprep.subr.mxu0 0.0
        %2024 = vmatpush2.msra.mxu0 0.0
        %2025 = vmatprep.subr.mxu0 0.0
        %2026 = vmatpush2.msra.mxu0 0.0
        %2027 = vmatprep.subr.mxu0 0.0
        %2028 = vmatpush2.msra.mxu0 0.0
        %2029 = vmatprep.subr.mxu0 0.0
        %2030 = vmatpush2.msra.mxu0 0.0
        %2031 = vmatprep.subr.mxu0 0.0
        %2032 = vmatpush2.msra.mxu0 0.0
        %2033 = vmatprep.subr.mxu0 0.0
        %2034 = vmatpush2.msra.mxu0 0.0
        %2035 = vmatprep.subr.mxu0 0.0
        %2036 = vmatpush2.msra.mxu0 0.0
        %2037 = vmatprep.subr.mxu0 0.0
        %2038 = vmatpush2.msra.mxu0 0.0
        %2039 = vmatprep.subr.mxu0 0.0
        %2040 = vmatpush2.msra.mxu0 0.0
        %2041 = vmatprep.subr.mxu0 0.0
        %2042 = vmatpush2.msra.mxu0 0.0
        %2043 = vmatprep.subr.mxu0 0.0
        %2044 = vmatpush2.msra.mxu0 0.0
        %2045 = vmatprep.subr.mxu0 0.0
        %2046 = vmatpush2.msra.mxu0 0.0
        %2047 = vmatprep.subr.mxu0 0.0
        %2048 = vmatpush2.msra.mxu0 0.0
        %2049 = vmatprep.subr.mxu0 0.0
        %2050 = vmatpush2.msra.mxu0 0.0
        %2051 = vmatprep.subr.mxu0 0.0
        %2052 = vmatpush2.msra.mxu0 0.0
        %2053 = vmatprep.subr.mxu0 0.0
        %2054 = vmatpush2.msra.mxu0 0.0
        %2055 = vmatprep.mubr.f32.mxu0 0.0
        %2056 = vmatmul.mubr.f32.gmra.mxu0 %v1915
        %v2057 = vpop.f32.mrf.mxu0
        %v2058 = vadd.f32 0.0, %v2057
        %v2059 = vpop.f32.mrf.mxu0
        %v2060 = vadd.f32 0.0, %v2059
        %2061 = vdwg.mxu0
        %v2062 = vadd.f32 %v1916, %v1987
        %v2063 = vadd.f32 %v1917, %v1989
        %v2064 = vadd.f32 %v1918, %v2058
        %v2065 = vadd.f32 %v1919, %v2060
        %v2066 = vmul.f32 %v2062, 0.5
        %v2067 = vmul.f32 %v2063, 0.5
        %v2068 = vmul.f32 %v2064, 0.5
        %v2069 = vtanh.pop %v2066
        %v2070 = vtanh.pop %v2067
        %v2071 = vtanh.pop %v2068
        %v2072 = vadd.f32 %v2069, 1.0
        %v2073 = vadd.f32 %v2070, 1.0
        %v2074 = vadd.f32 %v2071, 1.0
        %v2075 = vmul.f32 %v2072, 0.5
        %v2076 = vmul.f32 %v2073, 0.5
        %v2077 = vmul.f32 %v2074, 0.5
        %v2078 = vtanh.pop %v2065
        %v2079 = vmul.f32 %v2076, %v1913
        %v2080 = vmul.f32 %v2075, %v2078
        %v2081 = vadd.f32 %v2079, %v2080
        %v2082 = vtanh.pop %v2081
        %v2083 = vmul.f32 %v2077, %v2082
        %p2084 = scmp.lt.s32.totalorder %s31, 3
        // Predicated region
        $region81: #{tpu_custom_call.1} parent=51 // pred_check
          %p2085 = pneg %p2084
        $region82: #{tpu_custom_call.1} parent=51 // pred_check_branch
          %2087 = sbr.rel (%p2085) target = $region84
        $region83: #{tpu_custom_call.1} parent=51 // pred_region
          %2088 = vst [vmem:[#allocation2] sm:$0xff] %v907
          %2089 = vst [vmem:[#allocation2 + $0x8] sm:$0xff] %v1075
          %2090 = vst [vmem:[#allocation2 + $0x10] sm:$0xff] %v1243
          %2091 = vst [vmem:[#allocation2 + $0x18] sm:$0xff] %v1411
          %2092 = vst [vmem:[#allocation2 + $0x20] sm:$0xff] %v1579
          %2093 = vst [vmem:[#allocation2 + $0x28] sm:$0xff] %v1747
          %2094 = vst [vmem:[#allocation2 + $0x30] sm:$0xff] %v1915
          %2095 = vst [vmem:[#allocation2 + $0x38] sm:$0xff] %v2083
        $region84: #{tpu_custom_call.1} parent=51 // pred_fallthru
          _
        %p2096 = scmp.eq.s32.totalorder %s31, 3
        // Predicated region
        $region85: #{tpu_custom_call.1} parent=51 // pred_check
          %p2097 = pneg %p2096
        $region86: #{tpu_custom_call.1} parent=51 // pred_check_branch
          %2099 = sbr.rel (%p2097) target = $region88
        $region87: #{tpu_custom_call.1} parent=51 // pred_region
          %v2100 = vld [vmem:[#allocation12] sm:$0xff]
          %v2101 = vld [vmem:[#allocation12 + $0x8] sm:$0xff]
          %v2102 = vld [vmem:[#allocation12 + $0x10] sm:$0xff]
          %v2103 = vld [vmem:[#allocation12 + $0x18] sm:$0xff]
          %v2104 = vld [vmem:[#allocation12 + $0x20] sm:$0xff]
          %v2105 = vld [vmem:[#allocation12 + $0x28] sm:$0xff]
          %v2106 = vld [vmem:[#allocation12 + $0x30] sm:$0xff]
          %v2107 = vld [vmem:[#allocation12 + $0x38] sm:$0xff]
          %v2108 = vld [vmem:[#allocation12 + $0x40] sm:$0xff]
          %v2109 = vld [vmem:[#allocation12 + $0x48] sm:$0xff]
          %v2110 = vld [vmem:[#allocation12 + $0x50] sm:$0xff]
          %v2111 = vld [vmem:[#allocation12 + $0x58] sm:$0xff]
          %v2112 = vld [vmem:[#allocation12 + $0x60] sm:$0xff]
          %v2113 = vld [vmem:[#allocation12 + $0x68] sm:$0xff]
          %v2114 = vld [vmem:[#allocation12 + $0x70] sm:$0xff]
          %v2115 = vld [vmem:[#allocation12 + $0x78] sm:$0xff]
          %v2116 = vld [vmem:[%s5] sm:$0x1]
          %v2118 = vlaneseq
          %v2119 = vshrl.u32 %v2118, 7
          %v2120 = vsub.s32 0, %v2119
          %v2121 = vrot.slane %v2116, %v2120
          %2123 = vmatprep.subr.mxu0 0.0
          %2124 = vmatpush1.msra.mxu0 %v2115
          %2125 = vmatprep.subr.mxu0 0.0
          %2126 = vmatpush1.msra.mxu0 %v2114
          %2127 = vmatprep.subr.mxu0 0.0
          %2128 = vmatpush1.msra.mxu0 %v2113
          %2129 = vmatprep.subr.mxu0 0.0
          %2130 = vmatpush1.msra.mxu0 %v2112
          %2131 = vmatprep.subr.mxu0 0.0
          %2132 = vmatpush1.msra.mxu0 %v2111
          %2133 = vmatprep.subr.mxu0 0.0
          %2134 = vmatpush1.msra.mxu0 %v2110
          %2135 = vmatprep.subr.mxu0 0.0
          %2136 = vmatpush1.msra.mxu0 %v2109
          %2137 = vmatprep.subr.mxu0 0.0
          %2138 = vmatpush1.msra.mxu0 %v2108
          %2139 = vmatprep.subr.mxu0 0.0
          %2140 = vmatpush1.msra.mxu0 %v2107
          %2141 = vmatprep.subr.mxu0 0.0
          %2142 = vmatpush1.msra.mxu0 %v2106
          %2143 = vmatprep.subr.mxu0 0.0
          %2144 = vmatpush1.msra.mxu0 %v2105
          %2145 = vmatprep.subr.mxu0 0.0
          %2146 = vmatpush1.msra.mxu0 %v2104
          %2147 = vmatprep.subr.mxu0 0.0
          %2148 = vmatpush1.msra.mxu0 %v2103
          %2149 = vmatprep.subr.mxu0 0.0
          %2150 = vmatpush1.msra.mxu0 %v2102
          %2151 = vmatprep.subr.mxu0 0.0
          %2152 = vmatpush1.msra.mxu0 %v2101
          %2153 = vmatprep.subr.mxu0 0.0
          %2154 = vmatpush1.msra.mxu0 %v2100
          %2155 = vmatprep.subr.mxu0 0.0
          %2156 = vmatpush2.msra.mxu0 0.0
          %2157 = vmatprep.subr.mxu0 0.0
          %2158 = vmatpush2.msra.mxu0 0.0
          %2159 = vmatprep.subr.mxu0 0.0
          %2160 = vmatpush2.msra.mxu0 0.0
          %2161 = vmatprep.subr.mxu0 0.0
          %2162 = vmatpush2.msra.mxu0 0.0
          %2163 = vmatprep.subr.mxu0 0.0
          %2164 = vmatpush2.msra.mxu0 0.0
          %2165 = vmatprep.subr.mxu0 0.0
          %2166 = vmatpush2.msra.mxu0 0.0
          %2167 = vmatprep.subr.mxu0 0.0
          %2168 = vmatpush2.msra.mxu0 0.0
          %2169 = vmatprep.subr.mxu0 0.0
          %2170 = vmatpush2.msra.mxu0 0.0
          %2171 = vmatprep.subr.mxu0 0.0
          %2172 = vmatpush2.msra.mxu0 0.0
          %2173 = vmatprep.subr.mxu0 0.0
          %2174 = vmatpush2.msra.mxu0 0.0
          %2175 = vmatprep.subr.mxu0 0.0
          %2176 = vmatpush2.msra.mxu0 0.0
          %2177 = vmatprep.subr.mxu0 0.0
          %2178 = vmatpush2.msra.mxu0 0.0
          %2179 = vmatprep.subr.mxu0 0.0
          %2180 = vmatpush2.msra.mxu0 0.0
          %2181 = vmatprep.subr.mxu0 0.0
          %2182 = vmatpush2.msra.mxu0 0.0
          %2183 = vmatprep.subr.mxu0 0.0
          %2184 = vmatpush2.msra.mxu0 0.0
          %2185 = vmatprep.subr.mxu0 0.0
          %2186 = vmatpush2.msra.mxu0 0.0
          %2187 = vmatprep.mubr.f32.mxu0 0.0
          %2188 = vmatmul.mubr.f32.gmra.mxu0 %v2083
          %v2189 = vpop.f32.mrf.mxu0
          %v2190 = vadd.f32 %v2121, %v2189
          %v2191 = vpop.f32.mrf.mxu0
          %2192 = vdwg.mxu0
          %2193 = vst [vmem:[#allocation15] sm:$0xff] %v2190
          %v2194 = vld [vmem:[#allocation13] sm:$0xff]
          %v2195 = vld [vmem:[#allocation13 + $0x8] sm:$0xff]
          %v2196 = vld [vmem:[#allocation13 + $0x10] sm:$0xff]
          %v2197 = vld [vmem:[#allocation13 + $0x18] sm:$0xff]
          %v2198 = vld [vmem:[#allocation13 + $0x20] sm:$0xff]
          %v2199 = vld [vmem:[#allocation13 + $0x28] sm:$0xff]
          %v2200 = vld [vmem:[#allocation13 + $0x30] sm:$0xff]
          %v2201 = vld [vmem:[#allocation13 + $0x38] sm:$0xff]
          %v2202 = vld [vmem:[#allocation13 + $0x40] sm:$0xff]
          %v2203 = vld [vmem:[#allocation13 + $0x48] sm:$0xff]
          %v2204 = vld [vmem:[#allocation13 + $0x50] sm:$0xff]
          %v2205 = vld [vmem:[#allocation13 + $0x58] sm:$0xff]
          %v2206 = vld [vmem:[#allocation13 + $0x60] sm:$0xff]
          %v2207 = vld [vmem:[#allocation13 + $0x68] sm:$0xff]
          %v2208 = vld [vmem:[#allocation13 + $0x70] sm:$0xff]
          %v2209 = vld [vmem:[#allocation13 + $0x78] sm:$0xff]
          %v2210 = vld [vmem:[%s7] sm:$0x1]
          %v2212 = vlaneseq
          %v2213 = vshrl.u32 %v2212, 7
          %v2214 = vsub.s32 0, %v2213
          %v2215 = vrot.slane %v2210, %v2214
          %2217 = vmatprep.subr.mxu0 0.0
          %2218 = vmatpush1.msra.mxu0 %v2209
          %2219 = vmatprep.subr.mxu0 0.0
          %2220 = vmatpush1.msra.mxu0 %v2208
          %2221 = vmatprep.subr.mxu0 0.0
          %2222 = vmatpush1.msra.mxu0 %v2207
          %2223 = vmatprep.subr.mxu0 0.0
          %2224 = vmatpush1.msra.mxu0 %v2206
          %2225 = vmatprep.subr.mxu0 0.0
          %2226 = vmatpush1.msra.mxu0 %v2205
          %2227 = vmatprep.subr.mxu0 0.0
          %2228 = vmatpush1.msra.mxu0 %v2204
          %2229 = vmatprep.subr.mxu0 0.0
          %2230 = vmatpush1.msra.mxu0 %v2203
          %2231 = vmatprep.subr.mxu0 0.0
          %2232 = vmatpush1.msra.mxu0 %v2202
          %2233 = vmatprep.subr.mxu0 0.0
          %2234 = vmatpush1.msra.mxu0 %v2201
          %2235 = vmatprep.subr.mxu0 0.0
          %2236 = vmatpush1.msra.mxu0 %v2200
          %2237 = vmatprep.subr.mxu0 0.0
          %2238 = vmatpush1.msra.mxu0 %v2199
          %2239 = vmatprep.subr.mxu0 0.0
          %2240 = vmatpush1.msra.mxu0 %v2198
          %2241 = vmatprep.subr.mxu0 0.0
          %2242 = vmatpush1.msra.mxu0 %v2197
          %2243 = vmatprep.subr.mxu0 0.0
          %2244 = vmatpush1.msra.mxu0 %v2196
          %2245 = vmatprep.subr.mxu0 0.0
          %2246 = vmatpush1.msra.mxu0 %v2195
          %2247 = vmatprep.subr.mxu0 0.0
          %2248 = vmatpush1.msra.mxu0 %v2194
          %2249 = vmatprep.subr.mxu0 0.0
          %2250 = vmatpush2.msra.mxu0 0.0
          %2251 = vmatprep.subr.mxu0 0.0
          %2252 = vmatpush2.msra.mxu0 0.0
          %2253 = vmatprep.subr.mxu0 0.0
          %2254 = vmatpush2.msra.mxu0 0.0
          %2255 = vmatprep.subr.mxu0 0.0
          %2256 = vmatpush2.msra.mxu0 0.0
          %2257 = vmatprep.subr.mxu0 0.0
          %2258 = vmatpush2.msra.mxu0 0.0
          %2259 = vmatprep.subr.mxu0 0.0
          %2260 = vmatpush2.msra.mxu0 0.0
          %2261 = vmatprep.subr.mxu0 0.0
          %2262 = vmatpush2.msra.mxu0 0.0
          %2263 = vmatprep.subr.mxu0 0.0
          %2264 = vmatpush2.msra.mxu0 0.0
          %2265 = vmatprep.subr.mxu0 0.0
          %2266 = vmatpush2.msra.mxu0 0.0
          %2267 = vmatprep.subr.mxu0 0.0
          %2268 = vmatpush2.msra.mxu0 0.0
          %2269 = vmatprep.subr.mxu0 0.0
          %2270 = vmatpush2.msra.mxu0 0.0
          %2271 = vmatprep.subr.mxu0 0.0
          %2272 = vmatpush2.msra.mxu0 0.0
          %2273 = vmatprep.subr.mxu0 0.0
          %2274 = vmatpush2.msra.mxu0 0.0
          %2275 = vmatprep.subr.mxu0 0.0
          %2276 = vmatpush2.msra.mxu0 0.0
          %2277 = vmatprep.subr.mxu0 0.0
          %2278 = vmatpush2.msra.mxu0 0.0
          %2279 = vmatprep.subr.mxu0 0.0
          %2280 = vmatpush2.msra.mxu0 0.0
          %2281 = vmatprep.mubr.f32.mxu0 0.0
          %2282 = vmatmul.mubr.f32.gmra.mxu0 %v2190
          %v2283 = vpop.f32.mrf.mxu0
          %v2284 = vadd.f32 %v2215, %v2283
          %v2285 = vpop.f32.mrf.mxu0
          %2286 = vdwg.mxu0
          %2287 = vst [vmem:[#allocation16] sm:$0xff] %v2284
        $region88: #{tpu_custom_call.1} parent=51 // pred_fallthru
          _
        // Predicated region
        $region89: #{tpu_custom_call.1} parent=51 // pred_check
          %p2288 = pneg %p227
        $region90: #{tpu_custom_call.1} parent=51 // pred_check_branch
          %2290 = sbr.rel (%p2288) target = $region92
        $region91: #{tpu_custom_call.1} parent=51 // pred_region
          %s2292 = ssub.s32 128, 128
          %2293 = vsyncadd [#allocation6], %s2292
          %s2295 = sshll.u32 [#allocation15], 4
          %s2296 = int_to_ptr.vmem [resolvable:$true] %s2295
          %2298 = dma.vmem_to_hbm [thread:$0]  %s2296, 128, %s8, [#allocation6]
        $region92: #{tpu_custom_call.1} parent=51 // pred_fallthru
          _
        // Predicated region
        $region93: #{tpu_custom_call.1} parent=51 // pred_check
          %p2299 = pneg %p248
        $region94: #{tpu_custom_call.1} parent=51 // pred_check_branch
          %2301 = sbr.rel (%p2299) target = $region96
        $region95: #{tpu_custom_call.1} parent=51 // pred_region
          %s2303 = ssub.s32 128, 128
          %2304 = vsyncadd [#allocation17], %s2303
          %s2306 = sshll.u32 [#allocation16], 4
          %s2307 = int_to_ptr.vmem [resolvable:$true] %s2306
          %2309 = dma.vmem_to_hbm [thread:$0]  %s2307, 128, %s9, [#allocation17]
        $region96: #{tpu_custom_call.1} parent=51 // pred_fallthru
          _
        // Predicated region
        $region97: #{tpu_custom_call.1} parent=51 // pred_check
          %p2310 = pneg %p227
        $region98: #{tpu_custom_call.1} parent=51 // pred_check_branch
          %2312 = sbr.rel (%p2310) target = $region100
        $region99: #{tpu_custom_call.1} parent=51 // pred_region
          %2313 = dma.done [#allocation6], 128
        $region100: #{tpu_custom_call.1} parent=51 // pred_fallthru
          _
        // Predicated region
        $region101: #{tpu_custom_call.1} parent=51 // pred_check
          %p2314 = pneg %p248
        $region102: #{tpu_custom_call.1} parent=51 // pred_check_branch
          %2316 = sbr.rel (%p2314) target = $region104
        $region103: #{tpu_custom_call.1} parent=51 // pred_region
          %2317 = dma.done [#allocation17], 128
        $region104: #{tpu_custom_call.1} parent=51 // pred_fallthru
          _
      $region52: #{tpu_custom_call.1} parent=5 // pred_fallthru
        _
      %p2318 = scmp.le.s32.totalorder 2, %s26
      // Predicated region
      $region105: #{tpu_custom_call.1} parent=5 // pred_check
        %p2319 = pneg %p2318
      $region106: #{tpu_custom_call.1} parent=5 // pred_check_branch
        %2321 = sbr.rel (%p2319) target = $region108
      $region107: #{tpu_custom_call.1} parent=5 // pred_region
        %s2322 = ssub.s32 %s26, 2
      $region108: #{tpu_custom_call.1} parent=5 // pred_fallthru
        _
    $region6: #{tpu_custom_call.1} parent=1 // loop_footer
      %s30 = sadd.s32 1, %s26
    $region7: #{tpu_custom_call.1} parent=1 // loop_footer_branch
      %25 = sbr.rel target = $region3
    $region8: #{tpu_custom_call.1} parent=1 // loop_exit
      _
    %2323 = vsyncpa [#allocation5], 1
    %s2324 = scalar_lea.sflag [#allocation5], 1
    %2325 = vsyncpa %s2324, 1
    %2326 = vsyncpa [#allocation8], 1
    %s2327 = scalar_lea.sflag [#allocation8], 1
    %2328 = vsyncpa %s2327, 1
    %2329 = vsyncpa [#allocation11], 1
    %s2330 = scalar_lea.sflag [#allocation11], 1
    %2331 = vsyncpa %s2330, 1
    %2332 = vsyncpa [#allocation14], 1
    %2333 = vsyncpa [#allocation6], 1
    %s2334 = scalar_lea.sflag [#allocation6], 1
    %2335 = vsyncpa %s2334, 1
    %2336 = vsyncpa [#allocation17], 1

</llo_original>
